<compile_context>
chip_gen: v5e
topology: v5e:2x2
jax: 0.10.0
libtpu: 0.0.40
codegen_flags: <defaults>
</compile_context>

<pallas_src>
import numpy as np
import jax
import jax.numpy as jnp
from jax import lax
from jax.experimental import pallas as pl
from jax.experimental.pallas import tpu as pltpu

_EPS = 1e-5


# --------------------------------------------------------------------------------------
# Kernels
# --------------------------------------------------------------------------------------
def _stats_kernel(x_ref, s_ref):
    """Per-image BN partial statistics.  x_ref: (1, C, HW) -> s_ref: (1, C, 2)."""
    x = x_ref[0]                                              # (C, HW), lane-dense
    s = jnp.sum(x, axis=-1, keepdims=True)                    # (C, 1)  lane/XLU reduce
    s2 = jnp.sum(x * x, axis=-1, keepdims=True)               # (C, 1)
    s_ref[0] = jnp.concatenate([s, s2], axis=-1)              # (C, 2)


def _make_conv_kernel(K, H, W, *, add_residual, emit_stats):
    """BN(precomputed affine) -> conv (transposed im2col, single MXU dot) -> ReLU [+ residual]."""
    p = K // 2
    HW = H * W

    def kernel(*refs):
        x_ref, wt_ref, aff_ref, mask_ref = refs[0], refs[1], refs[2], refs[3]
        i = 4
        res_ref = None
        if add_residual:
            res_ref = refs[i]; i += 1
        o_ref = refs[i]; i += 1
        st_ref = refs[i] if emit_stats else None
        patch_ref = refs[-1]                                  # VMEM scratch (K*K*C, HW)

        C = x_ref.shape[1]
        aff = aff_ref[...]                                    # (C, 3): [bn_scale, bn_shift, conv_bias]
        scale = aff[:, 0:1]                                   # (C, 1) -> lane-broadcast
        shift = aff[:, 1:2]
        cbias = aff[:, 2:3]

        # BN with hoisted per-channel affine: one fused multiply-add over the whole image.
        xb = x_ref[0] * scale + shift                         # (C, HW)

        # Build the im2col patch with XLU rotates + precomputed 0/1 boundary masks
        # (no concat / cross-tile reshapes), staged at static offsets in VMEM scratch.
        for kh in range(K):
            for kw in range(K):
                t = kh * K + kw
                s = (-((kh - p) * W + (kw - p))) % HW         # roll so tap[q] = xb[q + dh*W + dw]
                tap = pltpu.roll(xb, s, 1) if s else xb       # (C, HW), XLU slot
                patch_ref[t * C:(t + 1) * C, :] = tap * mask_ref[t:t + 1, :]

        # One transposed-im2col matmul: (C, K*K*C) @ (K*K*C, HW) -> (C, HW), lane-dense output.
        acc = jnp.dot(wt_ref[...], patch_ref[...], preferred_element_type=jnp.float32)
        h = jnp.maximum(acc + cbias, 0.0)                     # (C, HW)

        if emit_stats:                                        # partial stats of next BN's input
            st_ref[0] = jnp.concatenate(
                [jnp.sum(h, axis=-1, keepdims=True),
                 jnp.sum(h * h, axis=-1, keepdims=True)], axis=-1)   # (C, 2)

        if add_residual:
            h = h + res_ref[0]
        o_ref[0] = h                                          # unmasked lane-dense store

    return kernel


# --------------------------------------------------------------------------------------
# Wrapper helpers
# --------------------------------------------------------------------------------------
def _tap_masks(H, W, K):
    """(K*K, H*W) 0/1 masks: zero where the shifted source position is outside the image."""
    p = K // 2
    q = np.arange(H * W)
    i, j = q // W, q % W
    rows = []
    for kh in range(K):
        for kw in range(K):
            dh, dw = kh - p, kw - p
            valid = (i + dh >= 0) & (i + dh < H) & (j + dw >= 0) & (j + dw < W)
            rows.append(valid.astype(np.float32))
    return jnp.asarray(np.stack(rows, axis=0))


def _affine_params(stats, gamma, beta, conv_bias, count):
    """BN scale/shift (training-mode batch stats, biased variance) + conv bias -> (C, 3)."""
    s = jnp.sum(stats, axis=0)                                # (C, 2)
    mean = s[:, 0] / count
    var = jnp.maximum(s[:, 1] / count - mean * mean, 0.0)     # one-pass E[x^2]-E[x]^2
    scale = gamma.reshape(-1) * lax.rsqrt(var + _EPS)
    shift = beta.reshape(-1) - mean * scale
    return jnp.stack([scale, shift, conv_bias.reshape(-1)], axis=1)   # (C, 3)


# --------------------------------------------------------------------------------------
# Forward pass
# --------------------------------------------------------------------------------------
@jax.jit
def resblock_forward(x_nchw, g1, be1, w1, cb1, g2, be2, w2, cb2):
    """x_nchw: (N, C, H, W) float32 -> (N, C, H, W) float32 (training-mode BN)."""
    N, C, H, W = x_nchw.shape
    K = w1.shape[0]
    assert K % 2 == 1, "only odd kernel sizes give PyTorch-style 'same' padding"
    HW = H * W
    count = jnp.float32(N * HW)

    # NCHW -> (N, C, H*W) is a free reshape (contiguous), and so is the inverse at the end:
    # no layout transposes anywhere in the pipeline.
    x2 = x_nchw.reshape(N, C, HW).astype(jnp.float32)

    # Transposed im2col weights: (K, K, Cin, Cout) -> (Cout, K*K*Cin), flattened once here,
    # row ordering matches the patch rows (t = kh*K + kw, then ci).
    wt1 = w1.reshape(K * K * C, C).T.astype(jnp.float32)
    wt2 = w2.reshape(K * K * C, C).T.astype(jnp.float32)

    masks = _tap_masks(H, W, K)                               # (K*K, HW) constant

    cparams = pltpu.CompilerParams(dimension_semantics=("parallel",))

    img_spec = pl.BlockSpec((1, C, HW), lambda n: (n, 0, 0))
    wt_spec = pl.BlockSpec((C, K * K * C), lambda n: (0, 0))
    aff_spec = pl.BlockSpec((C, 3), lambda n: (0, 0))
    mask_spec = pl.BlockSpec((K * K, HW), lambda n: (0, 0))
    st_spec = pl.BlockSpec((1, C, 2), lambda n: (n, 0, 0))
    st_shape = jax.ShapeDtypeStruct((N, C, 2), jnp.float32)
    act_shape = jax.ShapeDtypeStruct((N, C, HW), jnp.float32)
    patch_scratch = pltpu.VMEM((K * K * C, HW), jnp.float32)

    # ---- phase 1: BN1 batch statistics of x (Pallas partials, tiny reduce in XLA) ----
    s1 = pl.pallas_call(
        _stats_kernel,
        grid=(N,),
        in_specs=[img_spec],
        out_specs=st_spec,
        out_shape=st_shape,
        compiler_params=cparams,
    )(x2)
    aff1 = _affine_params(s1, g1, be1, cb1, count)

    # ---- phase 2: h1 = ReLU(conv1(BN1(x))), fused with partial stats of h1 ----
    h1, s2 = pl.pallas_call(
        _make_conv_kernel(K, H, W, add_residual=False, emit_stats=True),
        grid=(N,),
        in_specs=[img_spec, wt_spec, aff_spec, mask_spec],
        out_specs=[img_spec, st_spec],
        out_shape=[act_shape, st_shape],
        scratch_shapes=[patch_scratch],
        compiler_params=cparams,
    )(x2, wt1, aff1, masks)
    aff2 = _affine_params(s2, g2, be2, cb2, count)

    # ---- phase 3: out = ReLU(conv2(BN2(h1))) + x ----
    out = pl.pallas_call(
        _make_conv_kernel(K, H, W, add_residual=True, emit_stats=False),
        grid=(N,),
        in_specs=[img_spec, wt_spec, aff_spec, mask_spec, img_spec],
        out_specs=img_spec,
        out_shape=act_shape,
        scratch_shapes=[patch_scratch],
        compiler_params=cparams,
    )(h1, wt2, aff2, masks, x2)

    return out.reshape(N, C, H, W)                            # free reshape back to NCHW


# --------------------------------------------------------------------------------------
# Reference (pure JAX) and test harness
# --------------------------------------------------------------------------------------
def _reference(x, g1, be1, w1, cb1, g2, be2, w2, cb2):
    def bn(v, g, b):
        mean = jnp.mean(v, axis=(0, 2, 3), keepdims=True)
        var = jnp.var(v, axis=(0, 2, 3), keepdims=True)        # biased, training-mode BN
        return (v - mean) * lax.rsqrt(var + _EPS) * g.reshape(1, -1, 1, 1) + b.reshape(1, -1, 1, 1)

    def conv(v, w, b):
        wt = jnp.transpose(w, (3, 2, 0, 1))                    # (K,K,Cin,Cout) -> OIHW
        y = lax.conv_general_dilated(v, wt, (1, 1), "SAME",
                                     dimension_numbers=("NCHW", "OIHW", "NCHW"))
        return y + b.reshape(1, -1, 1, 1)

    h = jnp.maximum(conv(bn(x, g1, be1), w1, cb1), 0.0)
    h = jnp.maximum(conv(bn(h, g2, be2), w2, cb2), 0.0)
    return h + x


def make_params(num_feats, kernel_size, key):
    """Deterministic synthetic parameters matching the module's shapes."""
    C, K = num_feats, kernel_size
    k1, k2, k3, k4 = jax.random.split(key, 4)
    return dict(
        # BatchNorm2d defaults: gamma=1, beta=0
        g1=jnp.ones((1, C), jnp.float32),
        be1=jnp.zeros((1, C), jnp.float32),
        g2=jnp.ones((1, C), jnp.float32),
        be2=jnp.zeros((1, C), jnp.float32),
        # Conv2d weights stored as (K, K, Cin, Cout)
        w1=0.1 * jax.random.normal(k1, (K, K, C, C), jnp.float32),
        cb1=0.05 * jax.random.normal(k2, (1, C), jnp.float32),
        w2=0.1 * jax.random.normal(k3, (K, K, C, C), jnp.float32),
        cb2=0.05 * jax.random.normal(k4, (1, C), jnp.float32),
    )


if __name__ == "__main__":
    num_feats, kernel_size = 4, 3
    key = jax.random.PRNGKey(0)
    kx, kp = jax.random.split(key)

    x = jax.random.normal(kx, (2, num_feats, 16, 16), jnp.float32)   # NCHW
    params = make_params(num_feats, kernel_size, kp)
    args = (params["g1"], params["be1"], params["w1"], params["cb1"],
            params["g2"], params["be2"], params["w2"], params["cb2"])

    y = resblock_forward(x, *args)
    jax.block_until_ready(y)

    y_ref = _reference(x, *args)
    assert y.shape == x.shape and y.dtype == jnp.float32
    assert bool(jnp.allclose(y, y_ref, atol=1e-3, rtol=1e-3)), \
        float(jnp.max(jnp.abs(y - y_ref)))
    print("KERNEL_OK")
</pallas_src>

<mosaic_0001>
module attributes {stable_mosaic.version = 11 : i64} {
  func.func @_stats_kernel(%arg0: i32, %arg1: memref<1x4x256xf32, #tpu.memory_space<vmem>>, %arg2: memref<1x4x2xf32, #tpu.memory_space<vmem>>) attributes {dimension_semantics = [#tpu.dimension_semantics<parallel>], iteration_bounds = array<i64: 2>, scalar_prefetch = 0 : i64, scratch_operands = 0 : i64, tpu.core_type = #tpu.core_type<tc>, window_params = [{transform_indices = @transform_0, window_bounds = array<i64: 1, 4, 256>}, {transform_indices = @transform_1, window_bounds = array<i64: 1, 4, 2>}]} {
    %c0 = arith.constant 0 : index
    %c0_0 = arith.constant 0 : index
    %c0_1 = arith.constant 0 : index
    %0 = vector.load %arg1[%c0, %c0_0, %c0_1] : memref<1x4x256xf32, #tpu.memory_space<vmem>>, vector<1x4x256xf32>
    %1 = vector.shape_cast %0 : vector<1x4x256xf32> to vector<4x256xf32>
    %cst = arith.constant dense<0.000000e+00> : vector<4xf32>
    %2 = vector.multi_reduction <add>, %1, %cst [1] : vector<4x256xf32> to vector<4xf32>
    %3 = vector.shape_cast %2 : vector<4xf32> to vector<4x1xf32>
    %4 = arith.mulf %1, %1 : vector<4x256xf32>
    %cst_2 = arith.constant dense<0.000000e+00> : vector<4xf32>
    %5 = vector.multi_reduction <add>, %4, %cst_2 [1] : vector<4x256xf32> to vector<4xf32>
    %6 = vector.shape_cast %5 : vector<4xf32> to vector<4x1xf32>
    %7 = tpu.concatenate %3, %6 in 1 : vector<4x1xf32>, vector<4x1xf32> -> vector<4x2xf32>
    %c0_3 = arith.constant 0 : index
    %c0_4 = arith.constant 0 : index
    %c0_5 = arith.constant 0 : index
    %8 = vector.load %arg2[%c0_3, %c0_4, %c0_5] : memref<1x4x2xf32, #tpu.memory_space<vmem>>, vector<1x4x2xf32>
    %9 = vector.shape_cast %8 : vector<1x4x2xf32> to vector<4x2xf32>
    %10 = vector.shape_cast %7 : vector<4x2xf32> to vector<1x4x2xf32>
    tpu.vector_store %arg2[%c0_3, %c0_4, %c0_5], %10 {strides = array<i32>} : memref<1x4x2xf32, #tpu.memory_space<vmem>>, vector<1x4x2xf32>,
    return
  }
  func.func @transform_0(%arg0: i32) -> (i32, i32, i32) {
    %c0_i32 = arith.constant 0 : i32
    %c0_i32_0 = arith.constant 0 : i32
    %c0_i32_1 = arith.constant 0 : i32
    return %arg0, %c0_i32, %c0_i32_0 : i32, i32, i32
  }
  func.func @transform_1(%arg0: i32) -> (i32, i32, i32) {
    %c0_i32 = arith.constant 0 : i32
    %c0_i32_0 = arith.constant 0 : i32
    %c0_i32_1 = arith.constant 0 : i32
    return %arg0, %c0_i32, %c0_i32_0 : i32, i32, i32
  }
}

module attributes {stable_mosaic.version = 11 : i64} {
  func.func @kernel(%arg0: i32, %arg1: memref<1x4x256xf32, #tpu.memory_space<vmem>>, %arg2: memref<4x36xf32, #tpu.memory_space<vmem>>, %arg3: memref<4x3xf32, #tpu.memory_space<vmem>>, %arg4: memref<9x256xf32, #tpu.memory_space<vmem>>, %arg5: memref<1x4x256xf32, #tpu.memory_space<vmem>>, %arg6: memref<1x4x2xf32, #tpu.memory_space<vmem>>, %arg7: memref<36x256xf32, #tpu.memory_space<vmem>>) attributes {dimension_semantics = [#tpu.dimension_semantics<parallel>], iteration_bounds = array<i64: 2>, scalar_prefetch = 0 : i64, scratch_operands = 1 : i64, tpu.core_type = #tpu.core_type<tc>, window_params = [{transform_indices = @transform_0, window_bounds = array<i64: 1, 4, 256>}, {pipeline_mode = #tpu.pipeline_mode<synchronous>, transform_indices = @transform_1, window_bounds = array<i64: 4, 36>}, {pipeline_mode = #tpu.pipeline_mode<synchronous>, transform_indices = @transform_2, window_bounds = array<i64: 4, 3>}, {pipeline_mode = #tpu.pipeline_mode<synchronous>, transform_indices = @transform_3, window_bounds = array<i64: 9, 256>}, {transform_indices = @transform_4, window_bounds = array<i64: 1, 4, 256>}, {transform_indices = @transform_5, window_bounds = array<i64: 1, 4, 2>}]} {
    %c0 = arith.constant 0 : index
    %c0_0 = arith.constant 0 : index
    %0 = vector.load %arg3[%c0, %c0_0] : memref<4x3xf32, #tpu.memory_space<vmem>>, vector<4x3xf32>
    %1 = vector.extract_strided_slice %0 {offsets = [0, 0], sizes = [4, 1], strides = [1, 1]} : vector<4x3xf32> to vector<4x1xf32>
    %2 = vector.extract_strided_slice %0 {offsets = [0, 1], sizes = [4, 1], strides = [1, 1]} : vector<4x3xf32> to vector<4x1xf32>
    %3 = vector.extract_strided_slice %0 {offsets = [0, 2], sizes = [4, 1], strides = [1, 1]} : vector<4x3xf32> to vector<4x1xf32>
    %c0_1 = arith.constant 0 : index
    %c0_2 = arith.constant 0 : index
    %c0_3 = arith.constant 0 : index
    %4 = vector.load %arg1[%c0_1, %c0_2, %c0_3] : memref<1x4x256xf32, #tpu.memory_space<vmem>>, vector<1x4x256xf32>
    %5 = vector.shape_cast %4 : vector<1x4x256xf32> to vector<4x256xf32>
    %6 = vector.broadcast %1 : vector<4x1xf32> to vector<4x256xf32>
    %7 = arith.mulf %5, %6 : vector<4x256xf32>
    %8 = vector.broadcast %2 : vector<4x1xf32> to vector<4x256xf32>
    %9 = arith.addf %7, %8 : vector<4x256xf32>
    %c17_i32 = arith.constant 17 : i32
    %10 = tpu.dynamic_rotate %9 by %c17_i32 dim 1 : vector<4x256xf32>, i32 -> vector<4x256xf32>
    %c0_4 = arith.constant 0 : index
    %c0_5 = arith.constant 0 : index
    %11 = vector.load %arg4[%c0_4, %c0_5] : memref<9x256xf32, #tpu.memory_space<vmem>>, vector<1x256xf32>
    %12 = vector.broadcast %11 : vector<1x256xf32> to vector<4x256xf32>
    %13 = arith.mulf %10, %12 : vector<4x256xf32>
    %c0_6 = arith.constant 0 : index
    %c0_7 = arith.constant 0 : index
    %14 = vector.load %arg7[%c0_6, %c0_7] : memref<36x256xf32, #tpu.memory_space<vmem>>, vector<4x256xf32>
    tpu.vector_store %arg7[%c0_6, %c0_7], %13 {strides = array<i32>} : memref<36x256xf32, #tpu.memory_space<vmem>>, vector<4x256xf32>,
    %c16_i32 = arith.constant 16 : i32
    %15 = tpu.dynamic_rotate %9 by %c16_i32 dim 1 : vector<4x256xf32>, i32 -> vector<4x256xf32>
    %c1 = arith.constant 1 : index
    %c0_8 = arith.constant 0 : index
    %16 = vector.load %arg4[%c1, %c0_8] : memref<9x256xf32, #tpu.memory_space<vmem>>, vector<1x256xf32>
    %17 = vector.broadcast %16 : vector<1x256xf32> to vector<4x256xf32>
    %18 = arith.mulf %15, %17 : vector<4x256xf32>
    %c4 = arith.constant 4 : index
    %c0_9 = arith.constant 0 : index
    %19 = vector.load %arg7[%c4, %c0_9] : memref<36x256xf32, #tpu.memory_space<vmem>>, vector<4x256xf32>
    tpu.vector_store %arg7[%c4, %c0_9], %18 {strides = array<i32>} : memref<36x256xf32, #tpu.memory_space<vmem>>, vector<4x256xf32>,
    %c15_i32 = arith.constant 15 : i32
    %20 = tpu.dynamic_rotate %9 by %c15_i32 dim 1 : vector<4x256xf32>, i32 -> vector<4x256xf32>
    %c2 = arith.constant 2 : index
    %c0_10 = arith.constant 0 : index
    %21 = vector.load %arg4[%c2, %c0_10] : memref<9x256xf32, #tpu.memory_space<vmem>>, vector<1x256xf32>
    %22 = vector.broadcast %21 : vector<1x256xf32> to vector<4x256xf32>
    %23 = arith.mulf %20, %22 : vector<4x256xf32>
    %c8 = arith.constant 8 : index
    %c0_11 = arith.constant 0 : index
    %24 = vector.load %arg7[%c8, %c0_11] : memref<36x256xf32, #tpu.memory_space<vmem>>, vector<4x256xf32>
    tpu.vector_store %arg7[%c8, %c0_11], %23 {strides = array<i32>} : memref<36x256xf32, #tpu.memory_space<vmem>>, vector<4x256xf32>,
    %c1_i32 = arith.constant 1 : i32
    %25 = tpu.dynamic_rotate %9 by %c1_i32 dim 1 : vector<4x256xf32>, i32 -> vector<4x256xf32>
    %c3 = arith.constant 3 : index
    %c0_12 = arith.constant 0 : index
    %26 = vector.load %arg4[%c3, %c0_12] : memref<9x256xf32, #tpu.memory_space<vmem>>, vector<1x256xf32>
    %27 = vector.broadcast %26 : vector<1x256xf32> to vector<4x256xf32>
    %28 = arith.mulf %25, %27 : vector<4x256xf32>
    %c12 = arith.constant 12 : index
    %c0_13 = arith.constant 0 : index
    %29 = vector.load %arg7[%c12, %c0_13] : memref<36x256xf32, #tpu.memory_space<vmem>>, vector<4x256xf32>
    tpu.vector_store %arg7[%c12, %c0_13], %28 {strides = array<i32>} : memref<36x256xf32, #tpu.memory_space<vmem>>, vector<4x256xf32>,
    %c4_14 = arith.constant 4 : index
    %c0_15 = arith.constant 0 : index
    %30 = vector.load %arg4[%c4_14, %c0_15] : memref<9x256xf32, #tpu.memory_space<vmem>>, vector<1x256xf32>
    %31 = vector.broadcast %30 : vector<1x256xf32> to vector<4x256xf32>
    %32 = arith.mulf %9, %31 : vector<4x256xf32>
    %c16 = arith.constant 16 : index
    %c0_16 = arith.constant 0 : index
    %33 = vector.load %arg7[%c16, %c0_16] : memref<36x256xf32, #tpu.memory_space<vmem>>, vector<4x256xf32>
    tpu.vector_store %arg7[%c16, %c0_16], %32 {strides = array<i32>} : memref<36x256xf32, #tpu.memory_space<vmem>>, vector<4x256xf32>,
    %c255_i32 = arith.constant 255 : i32
    %34 = tpu.dynamic_rotate %9 by %c255_i32 dim 1 : vector<4x256xf32>, i32 -> vector<4x256xf32>
    %c5 = arith.constant 5 : index
    %c0_17 = arith.constant 0 : index
    %35 = vector.load %arg4[%c5, %c0_17] : memref<9x256xf32, #tpu.memory_space<vmem>>, vector<1x256xf32>
    %36 = vector.broadcast %35 : vector<1x256xf32> to vector<4x256xf32>
    %37 = arith.mulf %34, %36 : vector<4x256xf32>
    %c20 = arith.constant 20 : index
    %c0_18 = arith.constant 0 : index
    %38 = vector.load %arg7[%c20, %c0_18] : memref<36x256xf32, #tpu.memory_space<vmem>>, vector<4x256xf32>
    tpu.vector_store %arg7[%c20, %c0_18], %37 {strides = array<i32>} : memref<36x256xf32, #tpu.memory_space<vmem>>, vector<4x256xf32>,
    %c241_i32 = arith.constant 241 : i32
    %39 = tpu.dynamic_rotate %9 by %c241_i32 dim 1 : vector<4x256xf32>, i32 -> vector<4x256xf32>
    %c6 = arith.constant 6 : index
    %c0_19 = arith.constant 0 : index
    %40 = vector.load %arg4[%c6, %c0_19] : memref<9x256xf32, #tpu.memory_space<vmem>>, vector<1x256xf32>
    %41 = vector.broadcast %40 : vector<1x256xf32> to vector<4x256xf32>
    %42 = arith.mulf %39, %41 : vector<4x256xf32>
    %c24 = arith.constant 24 : index
    %c0_20 = arith.constant 0 : index
    %43 = vector.load %arg7[%c24, %c0_20] : memref<36x256xf32, #tpu.memory_space<vmem>>, vector<4x256xf32>
    tpu.vector_store %arg7[%c24, %c0_20], %42 {strides = array<i32>} : memref<36x256xf32, #tpu.memory_space<vmem>>, vector<4x256xf32>,
    %c240_i32 = arith.constant 240 : i32
    %44 = tpu.dynamic_rotate %9 by %c240_i32 dim 1 : vector<4x256xf32>, i32 -> vector<4x256xf32>
    %c7 = arith.constant 7 : index
    %c0_21 = arith.constant 0 : index
    %45 = vector.load %arg4[%c7, %c0_21] : memref<9x256xf32, #tpu.memory_space<vmem>>, vector<1x256xf32>
    %46 = vector.broadcast %45 : vector<1x256xf32> to vector<4x256xf32>
    %47 = arith.mulf %44, %46 : vector<4x256xf32>
    %c28 = arith.constant 28 : index
    %c0_22 = arith.constant 0 : index
    %48 = vector.load %arg7[%c28, %c0_22] : memref<36x256xf32, #tpu.memory_space<vmem>>, vector<4x256xf32>
    tpu.vector_store %arg7[%c28, %c0_22], %47 {strides = array<i32>} : memref<36x256xf32, #tpu.memory_space<vmem>>, vector<4x256xf32>,
    %c239_i32 = arith.constant 239 : i32
    %49 = tpu.dynamic_rotate %9 by %c239_i32 dim 1 : vector<4x256xf32>, i32 -> vector<4x256xf32>
    %c8_23 = arith.constant 8 : index
    %c0_24 = arith.constant 0 : index
    %50 = vector.load %arg4[%c8_23, %c0_24] : memref<9x256xf32, #tpu.memory_space<vmem>>, vector<1x256xf32>
    %51 = vector.broadcast %50 : vector<1x256xf32> to vector<4x256xf32>
    %52 = arith.mulf %49, %51 : vector<4x256xf32>
    %c32 = arith.constant 32 : index
    %c0_25 = arith.constant 0 : index
    %53 = vector.load %arg7[%c32, %c0_25] : memref<36x256xf32, #tpu.memory_space<vmem>>, vector<4x256xf32>
    tpu.vector_store %arg7[%c32, %c0_25], %52 {strides = array<i32>} : memref<36x256xf32, #tpu.memory_space<vmem>>, vector<4x256xf32>,
    %c0_26 = arith.constant 0 : index
    %c0_27 = arith.constant 0 : index
    %54 = vector.load %arg2[%c0_26, %c0_27] : memref<4x36xf32, #tpu.memory_space<vmem>>, vector<4x36xf32>
    %c0_28 = arith.constant 0 : index
    %c0_29 = arith.constant 0 : index
    %55 = vector.load %arg7[%c0_28, %c0_29] : memref<36x256xf32, #tpu.memory_space<vmem>>, vector<36x256xf32>
    %cst = arith.constant dense<0.000000e+00> : vector<4x256xf32>
    %56 = tpu.matmul %54, %55, %cst {dimension_numbers = #tpu.dot_dimension_numbers<[1], [0], [0], [1], [0, 0, 1, 1], [], []>} : vector<4x36xf32>, vector<36x256xf32>, vector<4x256xf32> -> vector<4x256xf32>
    %57 = vector.broadcast %3 : vector<4x1xf32> to vector<4x256xf32>
    %58 = arith.addf %56, %57 : vector<4x256xf32>
    %cst_30 = arith.constant 0.000000e+00 : f32
    %59 = vector.broadcast %cst_30 : f32 to vector<4x256xf32>
    %60 = arith.maximumf %58, %59 : vector<4x256xf32>
    %cst_31 = arith.constant dense<0.000000e+00> : vector<4xf32>
    %61 = vector.multi_reduction <add>, %60, %cst_31 [1] : vector<4x256xf32> to vector<4xf32>
    %62 = vector.shape_cast %61 : vector<4xf32> to vector<4x1xf32>
    %63 = arith.mulf %60, %60 : vector<4x256xf32>
    %cst_32 = arith.constant dense<0.000000e+00> : vector<4xf32>
    %64 = vector.multi_reduction <add>, %63, %cst_32 [1] : vector<4x256xf32> to vector<4xf32>
    %65 = vector.shape_cast %64 : vector<4xf32> to vector<4x1xf32>
    %66 = tpu.concatenate %62, %65 in 1 : vector<4x1xf32>, vector<4x1xf32> -> vector<4x2xf32>
    %c0_33 = arith.constant 0 : index
    %c0_34 = arith.constant 0 : index
    %c0_35 = arith.constant 0 : index
    %67 = vector.load %arg6[%c0_33, %c0_34, %c0_35] : memref<1x4x2xf32, #tpu.memory_space<vmem>>, vector<1x4x2xf32>
    %68 = vector.shape_cast %67 : vector<1x4x2xf32> to vector<4x2xf32>
    %69 = vector.shape_cast %66 : vector<4x2xf32> to vector<1x4x2xf32>
    tpu.vector_store %arg6[%c0_33, %c0_34, %c0_35], %69 {strides = array<i32>} : memref<1x4x2xf32, #tpu.memory_space<vmem>>, vector<1x4x2xf32>,
    %c0_36 = arith.constant 0 : index
    %c0_37 = arith.constant 0 : index
    %c0_38 = arith.constant 0 : index
    %70 = vector.load %arg5[%c0_36, %c0_37, %c0_38] : memref<1x4x256xf32, #tpu.memory_space<vmem>>, vector<1x4x256xf32>
    %71 = vector.shape_cast %70 : vector<1x4x256xf32> to vector<4x256xf32>
    %72 = vector.shape_cast %60 : vector<4x256xf32> to vector<1x4x256xf32>
    tpu.vector_store %arg5[%c0_36, %c0_37, %c0_38], %72 {strides = array<i32>} : memref<1x4x256xf32, #tpu.memory_space<vmem>>, vector<1x4x256xf32>,
    return
  }
  func.func @transform_0(%arg0: i32) -> (i32, i32, i32) {
    %c0_i32 = arith.constant 0 : i32
    %c0_i32_0 = arith.constant 0 : i32
    %c0_i32_1 = arith.constant 0 : i32
    return %arg0, %c0_i32, %c0_i32_0 : i32, i32, i32
  }
  func.func @transform_1(%arg0: i32) -> (i32, i32) {
    %c0_i32 = arith.constant 0 : i32
    %c0_i32_0 = arith.constant 0 : i32
    %c0_i32_1 = arith.constant 0 : i32
    return %c0_i32, %c0_i32_0 : i32, i32
  }
  func.func @transform_2(%arg0: i32) -> (i32, i32) {
    %c0_i32 = arith.constant 0 : i32
    %c0_i32_0 = arith.constant 0 : i32
    %c0_i32_1 = arith.constant 0 : i32
    return %c0_i32, %c0_i32_0 : i32, i32
  }
  func.func @transform_3(%arg0: i32) -> (i32, i32) {
    %c0_i32 = arith.constant 0 : i32
    %c0_i32_0 = arith.constant 0 : i32
    %c0_i32_1 = arith.constant 0 : i32
    return %c0_i32, %c0_i32_0 : i32, i32
  }
  func.func @transform_4(%arg0: i32) -> (i32, i32, i32) {
    %c0_i32 = arith.constant 0 : i32
    %c0_i32_0 = arith.constant 0 : i32
    %c0_i32_1 = arith.constant 0 : i32
    return %arg0, %c0_i32, %c0_i32_0 : i32, i32, i32
  }
  func.func @transform_5(%arg0: i32) -> (i32, i32, i32) {
    %c0_i32 = arith.constant 0 : i32
    %c0_i32_0 = arith.constant 0 : i32
    %c0_i32_1 = arith.constant 0 : i32
    return %arg0, %c0_i32, %c0_i32_0 : i32, i32, i32
  }
}

module attributes {stable_mosaic.version = 11 : i64} {
  func.func @kernel(%arg0: i32, %arg1: memref<1x4x256xf32, #tpu.memory_space<vmem>>, %arg2: memref<4x36xf32, #tpu.memory_space<vmem>>, %arg3: memref<4x3xf32, #tpu.memory_space<vmem>>, %arg4: memref<9x256xf32, #tpu.memory_space<vmem>>, %arg5: memref<1x4x256xf32, #tpu.memory_space<vmem>>, %arg6: memref<1x4x256xf32, #tpu.memory_space<vmem>>, %arg7: memref<36x256xf32, #tpu.memory_space<vmem>>) attributes {dimension_semantics = [#tpu.dimension_semantics<parallel>], iteration_bounds = array<i64: 2>, scalar_prefetch = 0 : i64, scratch_operands = 1 : i64, tpu.core_type = #tpu.core_type<tc>, window_params = [{transform_indices = @transform_0, window_bounds = array<i64: 1, 4, 256>}, {pipeline_mode = #tpu.pipeline_mode<synchronous>, transform_indices = @transform_1, window_bounds = array<i64: 4, 36>}, {pipeline_mode = #tpu.pipeline_mode<synchronous>, transform_indices = @transform_2, window_bounds = array<i64: 4, 3>}, {pipeline_mode = #tpu.pipeline_mode<synchronous>, transform_indices = @transform_3, window_bounds = array<i64: 9, 256>}, {transform_indices = @transform_4, window_bounds = array<i64: 1, 4, 256>}, {transform_indices = @transform_5, window_bounds = array<i64: 1, 4, 256>}]} {
    %c0 = arith.constant 0 : index
    %c0_0 = arith.constant 0 : index
    %0 = vector.load %arg3[%c0, %c0_0] : memref<4x3xf32, #tpu.memory_space<vmem>>, vector<4x3xf32>
    %1 = vector.extract_strided_slice %0 {offsets = [0, 0], sizes = [4, 1], strides = [1, 1]} : vector<4x3xf32> to vector<4x1xf32>
    %2 = vector.extract_strided_slice %0 {offsets = [0, 1], sizes = [4, 1], strides = [1, 1]} : vector<4x3xf32> to vector<4x1xf32>
    %3 = vector.extract_strided_slice %0 {offsets = [0, 2], sizes = [4, 1], strides = [1, 1]} : vector<4x3xf32> to vector<4x1xf32>
    %c0_1 = arith.constant 0 : index
    %c0_2 = arith.constant 0 : index
    %c0_3 = arith.constant 0 : index
    %4 = vector.load %arg1[%c0_1, %c0_2, %c0_3] : memref<1x4x256xf32, #tpu.memory_space<vmem>>, vector<1x4x256xf32>
    %5 = vector.shape_cast %4 : vector<1x4x256xf32> to vector<4x256xf32>
    %6 = vector.broadcast %1 : vector<4x1xf32> to vector<4x256xf32>
    %7 = arith.mulf %5, %6 : vector<4x256xf32>
    %8 = vector.broadcast %2 : vector<4x1xf32> to vector<4x256xf32>
    %9 = arith.addf %7, %8 : vector<4x256xf32>
    %c17_i32 = arith.constant 17 : i32
    %10 = tpu.dynamic_rotate %9 by %c17_i32 dim 1 : vector<4x256xf32>, i32 -> vector<4x256xf32>
    %c0_4 = arith.constant 0 : index
    %c0_5 = arith.constant 0 : index
    %11 = vector.load %arg4[%c0_4, %c0_5] : memref<9x256xf32, #tpu.memory_space<vmem>>, vector<1x256xf32>
    %12 = vector.broadcast %11 : vector<1x256xf32> to vector<4x256xf32>
    %13 = arith.mulf %10, %12 : vector<4x256xf32>
    %c0_6 = arith.constant 0 : index
    %c0_7 = arith.constant 0 : index
    %14 = vector.load %arg7[%c0_6, %c0_7] : memref<36x256xf32, #tpu.memory_space<vmem>>, vector<4x256xf32>
    tpu.vector_store %arg7[%c0_6, %c0_7], %13 {strides = array<i32>} : memref<36x256xf32, #tpu.memory_space<vmem>>, vector<4x256xf32>,
    %c16_i32 = arith.constant 16 : i32
    %15 = tpu.dynamic_rotate %9 by %c16_i32 dim 1 : vector<4x256xf32>, i32 -> vector<4x256xf32>
    %c1 = arith.constant 1 : index
    %c0_8 = arith.constant 0 : index
    %16 = vector.load %arg4[%c1, %c0_8] : memref<9x256xf32, #tpu.memory_space<vmem>>, vector<1x256xf32>
    %17 = vector.broadcast %16 : vector<1x256xf32> to vector<4x256xf32>
    %18 = arith.mulf %15, %17 : vector<4x256xf32>
    %c4 = arith.constant 4 : index
    %c0_9 = arith.constant 0 : index
    %19 = vector.load %arg7[%c4, %c0_9] : memref<36x256xf32, #tpu.memory_space<vmem>>, vector<4x256xf32>
    tpu.vector_store %arg7[%c4, %c0_9], %18 {strides = array<i32>} : memref<36x256xf32, #tpu.memory_space<vmem>>, vector<4x256xf32>,
    %c15_i32 = arith.constant 15 : i32
    %20 = tpu.dynamic_rotate %9 by %c15_i32 dim 1 : vector<4x256xf32>, i32 -> vector<4x256xf32>
    %c2 = arith.constant 2 : index
    %c0_10 = arith.constant 0 : index
    %21 = vector.load %arg4[%c2, %c0_10] : memref<9x256xf32, #tpu.memory_space<vmem>>, vector<1x256xf32>
    %22 = vector.broadcast %21 : vector<1x256xf32> to vector<4x256xf32>
    %23 = arith.mulf %20, %22 : vector<4x256xf32>
    %c8 = arith.constant 8 : index
    %c0_11 = arith.constant 0 : index
    %24 = vector.load %arg7[%c8, %c0_11] : memref<36x256xf32, #tpu.memory_space<vmem>>, vector<4x256xf32>
    tpu.vector_store %arg7[%c8, %c0_11], %23 {strides = array<i32>} : memref<36x256xf32, #tpu.memory_space<vmem>>, vector<4x256xf32>,
    %c1_i32 = arith.constant 1 : i32
    %25 = tpu.dynamic_rotate %9 by %c1_i32 dim 1 : vector<4x256xf32>, i32 -> vector<4x256xf32>
    %c3 = arith.constant 3 : index
    %c0_12 = arith.constant 0 : index
    %26 = vector.load %arg4[%c3, %c0_12] : memref<9x256xf32, #tpu.memory_space<vmem>>, vector<1x256xf32>
    %27 = vector.broadcast %26 : vector<1x256xf32> to vector<4x256xf32>
    %28 = arith.mulf %25, %27 : vector<4x256xf32>
    %c12 = arith.constant 12 : index
    %c0_13 = arith.constant 0 : index
    %29 = vector.load %arg7[%c12, %c0_13] : memref<36x256xf32, #tpu.memory_space<vmem>>, vector<4x256xf32>
    tpu.vector_store %arg7[%c12, %c0_13], %28 {strides = array<i32>} : memref<36x256xf32, #tpu.memory_space<vmem>>, vector<4x256xf32>,
    %c4_14 = arith.constant 4 : index
    %c0_15 = arith.constant 0 : index
    %30 = vector.load %arg4[%c4_14, %c0_15] : memref<9x256xf32, #tpu.memory_space<vmem>>, vector<1x256xf32>
    %31 = vector.broadcast %30 : vector<1x256xf32> to vector<4x256xf32>
    %32 = arith.mulf %9, %31 : vector<4x256xf32>
    %c16 = arith.constant 16 : index
    %c0_16 = arith.constant 0 : index
    %33 = vector.load %arg7[%c16, %c0_16] : memref<36x256xf32, #tpu.memory_space<vmem>>, vector<4x256xf32>
    tpu.vector_store %arg7[%c16, %c0_16], %32 {strides = array<i32>} : memref<36x256xf32, #tpu.memory_space<vmem>>, vector<4x256xf32>,
    %c255_i32 = arith.constant 255 : i32
    %34 = tpu.dynamic_rotate %9 by %c255_i32 dim 1 : vector<4x256xf32>, i32 -> vector<4x256xf32>
    %c5 = arith.constant 5 : index
    %c0_17 = arith.constant 0 : index
    %35 = vector.load %arg4[%c5, %c0_17] : memref<9x256xf32, #tpu.memory_space<vmem>>, vector<1x256xf32>
    %36 = vector.broadcast %35 : vector<1x256xf32> to vector<4x256xf32>
    %37 = arith.mulf %34, %36 : vector<4x256xf32>
    %c20 = arith.constant 20 : index
    %c0_18 = arith.constant 0 : index
    %38 = vector.load %arg7[%c20, %c0_18] : memref<36x256xf32, #tpu.memory_space<vmem>>, vector<4x256xf32>
    tpu.vector_store %arg7[%c20, %c0_18], %37 {strides = array<i32>} : memref<36x256xf32, #tpu.memory_space<vmem>>, vector<4x256xf32>,
    %c241_i32 = arith.constant 241 : i32
    %39 = tpu.dynamic_rotate %9 by %c241_i32 dim 1 : vector<4x256xf32>, i32 -> vector<4x256xf32>
    %c6 = arith.constant 6 : index
    %c0_19 = arith.constant 0 : index
    %40 = vector.load %arg4[%c6, %c0_19] : memref<9x256xf32, #tpu.memory_space<vmem>>, vector<1x256xf32>
    %41 = vector.broadcast %40 : vector<1x256xf32> to vector<4x256xf32>
    %42 = arith.mulf %39, %41 : vector<4x256xf32>
    %c24 = arith.constant 24 : index
    %c0_20 = arith.constant 0 : index
    %43 = vector.load %arg7[%c24, %c0_20] : memref<36x256xf32, #tpu.memory_space<vmem>>, vector<4x256xf32>
    tpu.vector_store %arg7[%c24, %c0_20], %42 {strides = array<i32>} : memref<36x256xf32, #tpu.memory_space<vmem>>, vector<4x256xf32>,
    %c240_i32 = arith.constant 240 : i32
    %44 = tpu.dynamic_rotate %9 by %c240_i32 dim 1 : vector<4x256xf32>, i32 -> vector<4x256xf32>
    %c7 = arith.constant 7 : index
    %c0_21 = arith.constant 0 : index
    %45 = vector.load %arg4[%c7, %c0_21] : memref<9x256xf32, #tpu.memory_space<vmem>>, vector<1x256xf32>
    %46 = vector.broadcast %45 : vector<1x256xf32> to vector<4x256xf32>
    %47 = arith.mulf %44, %46 : vector<4x256xf32>
    %c28 = arith.constant 28 : index
    %c0_22 = arith.constant 0 : index
    %48 = vector.load %arg7[%c28, %c0_22] : memref<36x256xf32, #tpu.memory_space<vmem>>, vector<4x256xf32>
    tpu.vector_store %arg7[%c28, %c0_22], %47 {strides = array<i32>} : memref<36x256xf32, #tpu.memory_space<vmem>>, vector<4x256xf32>,
    %c239_i32 = arith.constant 239 : i32
    %49 = tpu.dynamic_rotate %9 by %c239_i32 dim 1 : vector<4x256xf32>, i32 -> vector<4x256xf32>
    %c8_23 = arith.constant 8 : index
    %c0_24 = arith.constant 0 : index
    %50 = vector.load %arg4[%c8_23, %c0_24] : memref<9x256xf32, #tpu.memory_space<vmem>>, vector<1x256xf32>
    %51 = vector.broadcast %50 : vector<1x256xf32> to vector<4x256xf32>
    %52 = arith.mulf %49, %51 : vector<4x256xf32>
    %c32 = arith.constant 32 : index
    %c0_25 = arith.constant 0 : index
    %53 = vector.load %arg7[%c32, %c0_25] : memref<36x256xf32, #tpu.memory_space<vmem>>, vector<4x256xf32>
    tpu.vector_store %arg7[%c32, %c0_25], %52 {strides = array<i32>} : memref<36x256xf32, #tpu.memory_space<vmem>>, vector<4x256xf32>,
    %c0_26 = arith.constant 0 : index
    %c0_27 = arith.constant 0 : index
    %54 = vector.load %arg2[%c0_26, %c0_27] : memref<4x36xf32, #tpu.memory_space<vmem>>, vector<4x36xf32>
    %c0_28 = arith.constant 0 : index
    %c0_29 = arith.constant 0 : index
    %55 = vector.load %arg7[%c0_28, %c0_29] : memref<36x256xf32, #tpu.memory_space<vmem>>, vector<36x256xf32>
    %cst = arith.constant dense<0.000000e+00> : vector<4x256xf32>
    %56 = tpu.matmul %54, %55, %cst {dimension_numbers = #tpu.dot_dimension_numbers<[1], [0], [0], [1], [0, 0, 1, 1], [], []>} : vector<4x36xf32>, vector<36x256xf32>, vector<4x256xf32> -> vector<4x256xf32>
    %57 = vector.broadcast %3 : vector<4x1xf32> to vector<4x256xf32>
    %58 = arith.addf %56, %57 : vector<4x256xf32>
    %cst_30 = arith.constant 0.000000e+00 : f32
    %59 = vector.broadcast %cst_30 : f32 to vector<4x256xf32>
    %60 = arith.maximumf %58, %59 : vector<4x256xf32>
    %c0_31 = arith.constant 0 : index
    %c0_32 = arith.constant 0 : index
    %c0_33 = arith.constant 0 : index
    %61 = vector.load %arg5[%c0_31, %c0_32, %c0_33] : memref<1x4x256xf32, #tpu.memory_space<vmem>>, vector<1x4x256xf32>
    %62 = vector.shape_cast %61 : vector<1x4x256xf32> to vector<4x256xf32>
    %63 = arith.addf %60, %62 : vector<4x256xf32>
    %c0_34 = arith.constant 0 : index
    %c0_35 = arith.constant 0 : index
    %c0_36 = arith.constant 0 : index
    %64 = vector.load %arg6[%c0_34, %c0_35, %c0_36] : memref<1x4x256xf32, #tpu.memory_space<vmem>>, vector<1x4x256xf32>
    %65 = vector.shape_cast %64 : vector<1x4x256xf32> to vector<4x256xf32>
    %66 = vector.shape_cast %63 : vector<4x256xf32> to vector<1x4x256xf32>
    tpu.vector_store %arg6[%c0_34, %c0_35, %c0_36], %66 {strides = array<i32>} : memref<1x4x256xf32, #tpu.memory_space<vmem>>, vector<1x4x256xf32>,
    return
  }
  func.func @transform_0(%arg0: i32) -> (i32, i32, i32) {
    %c0_i32 = arith.constant 0 : i32
    %c0_i32_0 = arith.constant 0 : i32
    %c0_i32_1 = arith.constant 0 : i32
    return %arg0, %c0_i32, %c0_i32_0 : i32, i32, i32
  }
  func.func @transform_1(%arg0: i32) -> (i32, i32) {
    %c0_i32 = arith.constant 0 : i32
    %c0_i32_0 = arith.constant 0 : i32
    %c0_i32_1 = arith.constant 0 : i32
    return %c0_i32, %c0_i32_0 : i32, i32
  }
  func.func @transform_2(%arg0: i32) -> (i32, i32) {
    %c0_i32 = arith.constant 0 : i32
    %c0_i32_0 = arith.constant 0 : i32
    %c0_i32_1 = arith.constant 0 : i32
    return %c0_i32, %c0_i32_0 : i32, i32
  }
  func.func @transform_3(%arg0: i32) -> (i32, i32) {
    %c0_i32 = arith.constant 0 : i32
    %c0_i32_0 = arith.constant 0 : i32
    %c0_i32_1 = arith.constant 0 : i32
    return %c0_i32, %c0_i32_0 : i32, i32
  }
  func.func @transform_4(%arg0: i32) -> (i32, i32, i32) {
    %c0_i32 = arith.constant 0 : i32
    %c0_i32_0 = arith.constant 0 : i32
    %c0_i32_1 = arith.constant 0 : i32
    return %arg0, %c0_i32, %c0_i32_0 : i32, i32, i32
  }
  func.func @transform_5(%arg0: i32) -> (i32, i32, i32) {
    %c0_i32 = arith.constant 0 : i32
    %c0_i32_0 = arith.constant 0 : i32
    %c0_i32_1 = arith.constant 0 : i32
    return %arg0, %c0_i32, %c0_i32_0 : i32, i32, i32
  }
}

</mosaic_0001>

<llo_original>
// kernel: resblock_forward.3
$region0: #{resblock_forward.3}
  #allocation0 [shape = 'u32[]', space=smem, size = 0x4, offset = 0x4, fixed_abs, tag = 'smem constant byte address 0x4 - core index']
  #allocation1 [shape = 'u32[72,128]{1,0:T(1,128)}', space=vmem, size = 0x9000, scoped, tag = 'internal scratch']
  %s0 = inlined_call_operand.vmem [shape: f32[2,4,256], index: 0, kind: input, shape index: {}]
  %s1 = inlined_call_operand.vmem [shape: f32[2,4,2], index: 1, kind: output, shape index: {}]
  %s2 = sld [smem:[#allocation0]]
  $region37: #{resblock_forward.3} parent=0
    _
  %s4 = ssub.s32 1, %s2
  %s5 = scalar_select 0, %s4, %s2
  loop: start=0, step=1, limit=4
  $region2: #{resblock_forward.3} parent=0 // loop_pre_header
    _
  $region3: #{resblock_forward.3} parent=0 // loop_header
    %s7 = sphi 0, %s11
    %p8 = scmp.ge.s32.totalorder %s7, 4
    %s17 = sphi 0, %s19
    %s20 = sphi 0, %s17
    %s21 = sphi 0, %s20
    %s37 = sphi 0, %s21
    %s43 = sphi 0, %s45
    %s46 = sphi 0, %s43
    %s47 = sphi 0, %s46
    %s63 = sphi 0, %s47
  $region4: #{resblock_forward.3} parent=0 // loop_header_branch
    %10 = sbr.rel (%p8) target = $region8
  $region5: #{resblock_forward.3} parent=0 // loop_body
    %s12 = ssub.s32 %s7, 1
    %s13 = ssub.s32 %s7, 2
    %s14 = sadd.s32 %s7, 1
    %s15 = ssub.s32 %s7, %s14
    %p16 = scmp.eq.s32.totalorder %s15, 0
    %s18 = sadd.s32 %s17, 1
    %s19 = scalar_select %p16, %s17, %s18
    %p22 = pneg %p16
    %p23 = scmp.eq.s32.totalorder %s7, 1
    %p24 = por %p22, %p23
    %p25 = scmp.ne.s32.totalorder %s17, %s20
    %p26 = scmp.eq.s32.totalorder %s7, 0
    %p27 = por %p25, %p26
    %p28 = scmp.ne.s32.totalorder %s17, %s20
    %p29 = scmp.eq.s32.totalorder %s12, 1
    %p30 = por %p28, %p29
    %p31 = scmp.ne.s32.totalorder %s20, %s21
    %p32 = scmp.eq.s32.totalorder %s12, 0
    %p33 = por %p31, %p32
    %p34 = scmp.ne.s32.totalorder %s20, %s21
    %p35 = scmp.eq.s32.totalorder %s13, 1
    %p36 = por %p34, %p35
    %p38 = scmp.ne.s32.totalorder %s21, %s37
    %p39 = scmp.eq.s32.totalorder %s13, 0
    %p40 = por %p38, %p39
    %s41 = ssub.s32 %s7, %s14
    %p42 = scmp.eq.s32.totalorder %s41, 0
    %s44 = sadd.s32 %s43, 1
    %s45 = scalar_select %p42, %s43, %s44
    %p48 = pneg %p42
    %p49 = scmp.eq.s32.totalorder %s7, 1
    %p50 = por %p48, %p49
    %p51 = scmp.ne.s32.totalorder %s43, %s46
    %p52 = scmp.eq.s32.totalorder %s7, 0
    %p53 = por %p51, %p52
    %p54 = scmp.ne.s32.totalorder %s43, %s46
    %p55 = scmp.eq.s32.totalorder %s12, 1
    %p56 = por %p54, %p55
    %p57 = scmp.ne.s32.totalorder %s46, %s47
    %p58 = scmp.eq.s32.totalorder %s12, 0
    %p59 = por %p57, %p58
    %p60 = scmp.ne.s32.totalorder %s46, %s47
    %p61 = scmp.eq.s32.totalorder %s13, 1
    %p62 = por %p60, %p61
    %p64 = scmp.ne.s32.totalorder %s47, %s63
    %p65 = scmp.eq.s32.totalorder %s13, 0
    %p66 = por %p64, %p65
    %p67 = scmp.le.s32.totalorder 1, %s7
    %p68 = scmp.lt.s32.totalorder %s7, 3
    %p69 = pnand %p67, %p68
    %p70 = pneg %p69
    // Predicated region
    $region9: #{resblock_forward.3} parent=5 // pred_check
      _
    $region10: #{resblock_forward.3} parent=5 // pred_check_branch
      %72 = sbr.rel (%p69) target = $region12
    $region11: #{resblock_forward.3} parent=5 // pred_region
      %s73 = ssub.s32 %s7, 1
    $region12: #{resblock_forward.3} parent=5 // pred_fallthru
      _
    %p74 = scmp.lt.s32.totalorder %s7, 2
    // Predicated region
    $region13: #{resblock_forward.3} parent=5 // pred_check
      %p75 = pneg %p74
    $region14: #{resblock_forward.3} parent=5 // pred_check_branch
      %77 = sbr.rel (%p75) target = $region16
    $region15: #{resblock_forward.3} parent=5 // pred_region
      // Predicated region
      $region17: #{resblock_forward.3} parent=15 // pred_check
        %p78 = pneg %p27
      $region18: #{resblock_forward.3} parent=15 // pred_check_branch
        %80 = sbr.rel (%p78) target = $region20
      $region19: #{resblock_forward.3} parent=15 // pred_region
        %p81 = scmp.lt.s32.totalorder %s7, 1
        %s82 = scalar_select %p81, %s7, 1
        %s83 = smul.addr %s82, 2
        %s84 = smul.addr %s83, 4
        %s85 = scalar_lea.vmem %s0, %s84
      $region20: #{resblock_forward.3} parent=15 // pred_fallthru
        _
    $region16: #{resblock_forward.3} parent=5 // pred_fallthru
      _
    %p86 = scmp.le.s32.totalorder 1, %s7
    %p87 = scmp.lt.s32.totalorder %s7, 3
    %p88 = pnand %p86, %p87
    %p89 = pneg %p88
    // Predicated region
    $region21: #{resblock_forward.3} parent=5 // pred_check
      _
    $region22: #{resblock_forward.3} parent=5 // pred_check_branch
      %91 = sbr.rel (%p88) target = $region24
    $region23: #{resblock_forward.3} parent=5 // pred_region
      %s92 = ssub.s32 %s7, 1
      %p93 = scmp.lt.s32.totalorder %s12, 1
      %s94 = scalar_select %p93, %s12, 1
      %s95 = smul.addr %s94, 2
      %s96 = smul.addr %s95, 4
      %s97 = scalar_lea.vmem %s0, %s96
      %p98 = pneg %p33
      %p99 = pneg %p30
      %p100 = pneg %p59
      %p101 = pneg %p56
      %p102 = scmp.lt.s32.totalorder %s12, 1
      %s103 = scalar_select %p102, %s12, 1
      %s104 = smul.addr %s103, 4
      %s105 = scalar_lea.vmem %s1, %s104
      %p106 = scmp.lt.s32.totalorder %s12, 1
      %s107 = scalar_select %p106, %s12, 1
      %s108 = smul.addr %s107, 2
      %s109 = smul.addr %s108, 4
      %s110 = scalar_lea.vmem %s0, %s109
      %p111 = scmp.lt.s32.totalorder %s12, 1
      %s112 = scalar_select %p111, %s12, 1
      %s113 = smul.addr %s112, 4
      %s114 = scalar_lea.vmem %s1, %s113
      %v115 = vld [vmem:[%s110] sm:$0xff]
      %117 = vst [vmem:[#allocation1] ss:$2 sm:$0xff] %v115
      %v118 = vld.sshfl [vmem:[#allocation1] sm:$0xff pattern:$0x75316420]
      %v119 = vld.sshfl [vmem:[#allocation1 + $0x8] sm:$0xff pattern:$0x75316420]
      %vm122 = vcmask 1043456
      %v123 = vsel %vm122, %v118, 0.0
      %v124 = vsel %vm122, %v119, 0.0
      %v125 = vadd.f32 %v123, %v124
      %126 = vadd.xlane.f32.xlu0 %v125
      %v127 = vpop.xlane.xlu0 %126
      %v128 = vmul.f32 %v115, %v115
      %130 = vst [vmem:[#allocation1] ss:$2 sm:$0xff] %v128
      %v131 = vld.sshfl [vmem:[#allocation1] sm:$0xff pattern:$0x75316420]
      %v132 = vld.sshfl [vmem:[#allocation1 + $0x8] sm:$0xff pattern:$0x75316420]
      %v135 = vsel %vm122, %v131, 0.0
      %v136 = vsel %vm122, %v132, 0.0
      %v137 = vadd.f32 %v135, %v136
      %138 = vadd.xlane.f32.xlu0 %v137
      %v139 = vpop.xlane.xlu0 %138
      %vm140 = vcmask 7168
      %v141 = vsel %vm140, %v127, %v139
      %vm142 = vcmask 11264
      %143 = vst.msk [vmem:[%s114] sm:$0xf] %vm142, %v141
      %p144 = scmp.lt.s32.totalorder %s12, 1
      %s145 = scalar_select %p144, %s12, 1
      %s146 = smul.addr %s145, 4
      %s147 = scalar_lea.vmem %s1, %s146
      // Predicated region
      $region25: #{resblock_forward.3} parent=23 // pred_check
        %p148 = pneg %p56
      $region26: #{resblock_forward.3} parent=23 // pred_check_branch
        %150 = sbr.rel (%p148) target = $region28
      $region27: #{resblock_forward.3} parent=23 // pred_region
        _
      $region28: #{resblock_forward.3} parent=23 // pred_fallthru
        _
    $region24: #{resblock_forward.3} parent=5 // pred_fallthru
      _
    %p151 = scmp.le.s32.totalorder 2, %s7
    // Predicated region
    $region29: #{resblock_forward.3} parent=5 // pred_check
      %p152 = pneg %p151
    $region30: #{resblock_forward.3} parent=5 // pred_check_branch
      %154 = sbr.rel (%p152) target = $region32
    $region31: #{resblock_forward.3} parent=5 // pred_region
      %s155 = ssub.s32 %s7, 2
      // Predicated region
      $region33: #{resblock_forward.3} parent=31 // pred_check
        %p156 = pneg %p62
      $region34: #{resblock_forward.3} parent=31 // pred_check_branch
        %158 = sbr.rel (%p156) target = $region36
      $region35: #{resblock_forward.3} parent=31 // pred_region
        %p159 = scmp.lt.s32.totalorder %s13, 1
        %s160 = scalar_select %p159, %s13, 1
        %s161 = smul.addr %s160, 4
        %s162 = scalar_lea.vmem %s1, %s161
      $region36: #{resblock_forward.3} parent=31 // pred_fallthru
        _
    $region32: #{resblock_forward.3} parent=5 // pred_fallthru
      _
  $region6: #{resblock_forward.3} parent=0 // loop_footer
    %s11 = sadd.s32 1, %s7
  $region7: #{resblock_forward.3} parent=0 // loop_footer_branch
    %6 = sbr.rel target = $region3
  $region8: #{resblock_forward.3} parent=0 // loop_exit
    _

// kernel: resblock_forward.5
$region0: #{resblock_forward.5}
  #allocation0 [shape = 'u32[]', space=smem, size = 0x4, offset = 0x4, fixed_abs, tag = 'smem constant byte address 0x4 - core index']
  #allocation1 [shape = 'u32[72,128]{1,0:T(1,128)}', space=vmem, size = 0x9000, scoped, tag = 'internal scratch']
  #allocation2 [shape = 'f32[36,256]{1,0:T(8,128)}', space=vmem, size = 0xa000, scoped, tag = 'scratch operand']
  %s0 = inlined_call_operand.vmem [shape: f32[2,4,256], index: 0, kind: input, shape index: {}]
  %s1 = inlined_call_operand.vmem [shape: f32[4,36], index: 1, kind: input, shape index: {}]
  %s2 = inlined_call_operand.vmem [shape: f32[4,3], index: 2, kind: input, shape index: {}]
  %s3 = inlined_call_operand.vmem [shape: f32[9,256], index: 3, kind: input, shape index: {}]
  %s4 = inlined_call_operand.vmem [shape: f32[2,4,256], index: 4, kind: input, shape index: {}]
  %s5 = inlined_call_operand.vmem [shape: f32[2,4,256], index: 5, kind: output, shape index: {}]
  %s6 = sld [smem:[#allocation0]]
  $region53: #{resblock_forward.5} parent=0
    _
  %s8 = ssub.s32 1, %s6
  %s9 = scalar_select 0, %s8, %s6
  loop: start=0, step=1, limit=4
  $region2: #{resblock_forward.5} parent=0 // loop_pre_header
    _
  $region3: #{resblock_forward.5} parent=0 // loop_header
    %s11 = sphi 0, %s15
    %p12 = scmp.ge.s32.totalorder %s11, 4
    %s21 = sphi 0, %s23
    %s24 = sphi 0, %s21
    %s25 = sphi 0, %s24
    %s41 = sphi 0, %s25
    %s45 = sphi 0, %s45
    %s47 = sphi 0, %s45
    %s48 = sphi 0, %s47
    %s62 = sphi 0, %s48
    %s66 = sphi 0, %s66
    %s68 = sphi 0, %s66
    %s69 = sphi 0, %s68
    %s83 = sphi 0, %s69
    %s87 = sphi 0, %s87
    %s89 = sphi 0, %s87
    %s90 = sphi 0, %s89
    %s104 = sphi 0, %s90
    %s110 = sphi 0, %s112
    %s113 = sphi 0, %s110
    %s114 = sphi 0, %s113
    %s130 = sphi 0, %s114
    %s136 = sphi 0, %s138
    %s139 = sphi 0, %s136
    %s140 = sphi 0, %s139
    %s156 = sphi 0, %s140
  $region4: #{resblock_forward.5} parent=0 // loop_header_branch
    %14 = sbr.rel (%p12) target = $region8
  $region5: #{resblock_forward.5} parent=0 // loop_body
    %s16 = ssub.s32 %s11, 1
    %s17 = ssub.s32 %s11, 2
    %s18 = sadd.s32 %s11, 1
    %s19 = ssub.s32 %s11, %s18
    %p20 = scmp.eq.s32.totalorder %s19, 0
    %s22 = sadd.s32 %s21, 1
    %s23 = scalar_select %p20, %s21, %s22
    %p26 = pneg %p20
    %p27 = scmp.eq.s32.totalorder %s11, 1
    %p28 = por %p26, %p27
    %p29 = scmp.ne.s32.totalorder %s21, %s24
    %p30 = scmp.eq.s32.totalorder %s11, 0
    %p31 = por %p29, %p30
    %p32 = scmp.ne.s32.totalorder %s21, %s24
    %p33 = scmp.eq.s32.totalorder %s16, 1
    %p34 = por %p32, %p33
    %p35 = scmp.ne.s32.totalorder %s24, %s25
    %p36 = scmp.eq.s32.totalorder %s16, 0
    %p37 = por %p35, %p36
    %p38 = scmp.ne.s32.totalorder %s24, %s25
    %p39 = scmp.eq.s32.totalorder %s17, 1
    %p40 = por %p38, %p39
    %p42 = scmp.ne.s32.totalorder %s25, %s41
    %p43 = scmp.eq.s32.totalorder %s17, 0
    %p44 = por %p42, %p43
    %s46 = sadd.s32 %s45, 1
    %p49 = scmp.eq.s32.totalorder %s11, 1
    %p50 = scmp.ne.s32.totalorder %s45, %s47
    %p51 = scmp.eq.s32.totalorder %s11, 0
    %p52 = por %p50, %p51
    %p53 = scmp.ne.s32.totalorder %s45, %s47
    %p54 = scmp.eq.s32.totalorder %s16, 1
    %p55 = por %p53, %p54
    %p56 = scmp.ne.s32.totalorder %s47, %s48
    %p57 = scmp.eq.s32.totalorder %s16, 0
    %p58 = por %p56, %p57
    %p59 = scmp.ne.s32.totalorder %s47, %s48
    %p60 = scmp.eq.s32.totalorder %s17, 1
    %p61 = por %p59, %p60
    %p63 = scmp.ne.s32.totalorder %s48, %s62
    %p64 = scmp.eq.s32.totalorder %s17, 0
    %p65 = por %p63, %p64
    %s67 = sadd.s32 %s66, 1
    %p70 = scmp.eq.s32.totalorder %s11, 1
    %p71 = scmp.ne.s32.totalorder %s66, %s68
    %p72 = scmp.eq.s32.totalorder %s11, 0
    %p73 = por %p71, %p72
    %p74 = scmp.ne.s32.totalorder %s66, %s68
    %p75 = scmp.eq.s32.totalorder %s16, 1
    %p76 = por %p74, %p75
    %p77 = scmp.ne.s32.totalorder %s68, %s69
    %p78 = scmp.eq.s32.totalorder %s16, 0
    %p79 = por %p77, %p78
    %p80 = scmp.ne.s32.totalorder %s68, %s69
    %p81 = scmp.eq.s32.totalorder %s17, 1
    %p82 = por %p80, %p81
    %p84 = scmp.ne.s32.totalorder %s69, %s83
    %p85 = scmp.eq.s32.totalorder %s17, 0
    %p86 = por %p84, %p85
    %s88 = sadd.s32 %s87, 1
    %p91 = scmp.eq.s32.totalorder %s11, 1
    %p92 = scmp.ne.s32.totalorder %s87, %s89
    %p93 = scmp.eq.s32.totalorder %s11, 0
    %p94 = por %p92, %p93
    %p95 = scmp.ne.s32.totalorder %s87, %s89
    %p96 = scmp.eq.s32.totalorder %s16, 1
    %p97 = por %p95, %p96
    %p98 = scmp.ne.s32.totalorder %s89, %s90
    %p99 = scmp.eq.s32.totalorder %s16, 0
    %p100 = por %p98, %p99
    %p101 = scmp.ne.s32.totalorder %s89, %s90
    %p102 = scmp.eq.s32.totalorder %s17, 1
    %p103 = por %p101, %p102
    %p105 = scmp.ne.s32.totalorder %s90, %s104
    %p106 = scmp.eq.s32.totalorder %s17, 0
    %p107 = por %p105, %p106
    %s108 = ssub.s32 %s11, %s18
    %p109 = scmp.eq.s32.totalorder %s108, 0
    %s111 = sadd.s32 %s110, 1
    %s112 = scalar_select %p109, %s110, %s111
    %p115 = pneg %p109
    %p116 = scmp.eq.s32.totalorder %s11, 1
    %p117 = por %p115, %p116
    %p118 = scmp.ne.s32.totalorder %s110, %s113
    %p119 = scmp.eq.s32.totalorder %s11, 0
    %p120 = por %p118, %p119
    %p121 = scmp.ne.s32.totalorder %s110, %s113
    %p122 = scmp.eq.s32.totalorder %s16, 1
    %p123 = por %p121, %p122
    %p124 = scmp.ne.s32.totalorder %s113, %s114
    %p125 = scmp.eq.s32.totalorder %s16, 0
    %p126 = por %p124, %p125
    %p127 = scmp.ne.s32.totalorder %s113, %s114
    %p128 = scmp.eq.s32.totalorder %s17, 1
    %p129 = por %p127, %p128
    %p131 = scmp.ne.s32.totalorder %s114, %s130
    %p132 = scmp.eq.s32.totalorder %s17, 0
    %p133 = por %p131, %p132
    %s134 = ssub.s32 %s11, %s18
    %p135 = scmp.eq.s32.totalorder %s134, 0
    %s137 = sadd.s32 %s136, 1
    %s138 = scalar_select %p135, %s136, %s137
    %p141 = pneg %p135
    %p142 = scmp.eq.s32.totalorder %s11, 1
    %p143 = por %p141, %p142
    %p144 = scmp.ne.s32.totalorder %s136, %s139
    %p145 = scmp.eq.s32.totalorder %s11, 0
    %p146 = por %p144, %p145
    %p147 = scmp.ne.s32.totalorder %s136, %s139
    %p148 = scmp.eq.s32.totalorder %s16, 1
    %p149 = por %p147, %p148
    %p150 = scmp.ne.s32.totalorder %s139, %s140
    %p151 = scmp.eq.s32.totalorder %s16, 0
    %p152 = por %p150, %p151
    %p153 = scmp.ne.s32.totalorder %s139, %s140
    %p154 = scmp.eq.s32.totalorder %s17, 1
    %p155 = por %p153, %p154
    %p157 = scmp.ne.s32.totalorder %s140, %s156
    %p158 = scmp.eq.s32.totalorder %s17, 0
    %p159 = por %p157, %p158
    %p160 = scmp.le.s32.totalorder 1, %s11
    %p161 = scmp.lt.s32.totalorder %s11, 3
    %p162 = pnand %p160, %p161
    %p163 = pneg %p162
    // Predicated region
    $region9: #{resblock_forward.5} parent=5 // pred_check
      _
    $region10: #{resblock_forward.5} parent=5 // pred_check_branch
      %165 = sbr.rel (%p162) target = $region12
    $region11: #{resblock_forward.5} parent=5 // pred_region
      %s166 = ssub.s32 %s11, 1
      // Predicated region
      $region13: #{resblock_forward.5} parent=11 // pred_check
        %p167 = pneg %p58
      $region14: #{resblock_forward.5} parent=11 // pred_check_branch
        %169 = sbr.rel (%p167) target = $region16
      $region15: #{resblock_forward.5} parent=11 // pred_region
        _
      $region16: #{resblock_forward.5} parent=11 // pred_fallthru
        _
      // Predicated region
      $region17: #{resblock_forward.5} parent=11 // pred_check
        %p170 = pneg %p79
      $region18: #{resblock_forward.5} parent=11 // pred_check_branch
        %172 = sbr.rel (%p170) target = $region20
      $region19: #{resblock_forward.5} parent=11 // pred_region
        _
      $region20: #{resblock_forward.5} parent=11 // pred_fallthru
        _
      // Predicated region
      $region21: #{resblock_forward.5} parent=11 // pred_check
        %p173 = pneg %p100
      $region22: #{resblock_forward.5} parent=11 // pred_check_branch
        %175 = sbr.rel (%p173) target = $region24
      $region23: #{resblock_forward.5} parent=11 // pred_region
        _
      $region24: #{resblock_forward.5} parent=11 // pred_fallthru
        _
    $region12: #{resblock_forward.5} parent=5 // pred_fallthru
      _
    %p176 = scmp.lt.s32.totalorder %s11, 2
    // Predicated region
    $region25: #{resblock_forward.5} parent=5 // pred_check
      %p177 = pneg %p176
    $region26: #{resblock_forward.5} parent=5 // pred_check_branch
      %179 = sbr.rel (%p177) target = $region28
    $region27: #{resblock_forward.5} parent=5 // pred_region
      // Predicated region
      $region29: #{resblock_forward.5} parent=27 // pred_check
        %p180 = pneg %p31
      $region30: #{resblock_forward.5} parent=27 // pred_check_branch
        %182 = sbr.rel (%p180) target = $region32
      $region31: #{resblock_forward.5} parent=27 // pred_region
        %p183 = scmp.lt.s32.totalorder %s11, 1
        %s184 = scalar_select %p183, %s11, 1
        %s185 = smul.addr %s184, 2
        %s186 = smul.addr %s185, 4
        %s187 = scalar_lea.vmem %s0, %s186
      $region32: #{resblock_forward.5} parent=27 // pred_fallthru
        _
      // Predicated region
      $region33: #{resblock_forward.5} parent=27 // pred_check
        %p188 = pneg %p120
      $region34: #{resblock_forward.5} parent=27 // pred_check_branch
        %190 = sbr.rel (%p188) target = $region36
      $region35: #{resblock_forward.5} parent=27 // pred_region
        %p191 = scmp.lt.s32.totalorder %s11, 1
        %s192 = scalar_select %p191, %s11, 1
        %s193 = smul.addr %s192, 2
        %s194 = smul.addr %s193, 4
        %s195 = scalar_lea.vmem %s4, %s194
      $region36: #{resblock_forward.5} parent=27 // pred_fallthru
        _
    $region28: #{resblock_forward.5} parent=5 // pred_fallthru
      _
    %p196 = scmp.le.s32.totalorder 1, %s11
    %p197 = scmp.lt.s32.totalorder %s11, 3
    %p198 = pnand %p196, %p197
    %p199 = pneg %p198
    // Predicated region
    $region37: #{resblock_forward.5} parent=5 // pred_check
      _
    $region38: #{resblock_forward.5} parent=5 // pred_check_branch
      %201 = sbr.rel (%p198) target = $region40
    $region39: #{resblock_forward.5} parent=5 // pred_region
      %s202 = ssub.s32 %s11, 1
      %p203 = scmp.lt.s32.totalorder %s16, 1
      %s204 = scalar_select %p203, %s16, 1
      %s205 = smul.addr %s204, 2
      %s206 = smul.addr %s205, 4
      %s207 = scalar_lea.vmem %s0, %s206
      %p208 = pneg %p37
      %p209 = pneg %p34
      %p210 = pneg %p58
      %p211 = pneg %p55
      %p212 = pneg %p79
      %p213 = pneg %p76
      %p214 = pneg %p100
      %p215 = pneg %p97
      %p216 = scmp.lt.s32.totalorder %s16, 1
      %s217 = scalar_select %p216, %s16, 1
      %s218 = smul.addr %s217, 2
      %s219 = smul.addr %s218, 4
      %s220 = scalar_lea.vmem %s4, %s219
      %p221 = pneg %p126
      %p222 = pneg %p123
      %p223 = pneg %p152
      %p224 = pneg %p149
      %p225 = scmp.lt.s32.totalorder %s16, 1
      %s226 = scalar_select %p225, %s16, 1
      %s227 = smul.addr %s226, 2
      %s228 = smul.addr %s227, 4
      %s229 = scalar_lea.vmem %s5, %s228
      %p230 = scmp.lt.s32.totalorder %s16, 1
      %s231 = scalar_select %p230, %s16, 1
      %s232 = smul.addr %s231, 2
      %s233 = smul.addr %s232, 4
      %s234 = scalar_lea.vmem %s0, %s233
      %p235 = scmp.lt.s32.totalorder %s16, 1
      %s236 = scalar_select %p235, %s16, 1
      %s237 = smul.addr %s236, 2
      %s238 = smul.addr %s237, 4
      %s239 = scalar_lea.vmem %s4, %s238
      %p240 = scmp.lt.s32.totalorder %s16, 1
      %s241 = scalar_select %p240, %s16, 1
      %s242 = smul.addr %s241, 2
      %s243 = smul.addr %s242, 4
      %s244 = scalar_lea.vmem %s5, %s243
      %v245 = vld [vmem:[%s2] sm:$0xf]
      %v246 = vld [vmem:[%s234] sm:$0xff]
      %248 = vset.pattern.permute.xlu0 0
      %249 = vperm.xlu0 %248, %v245
      %v250 = vpop.permute.xlu0 %249
      %v252 = vunpack.c.l.s4 839922192
      %v253 = vunpack.c.0.s8 %v252
      %v254 = vperm.slane %v250, %v253
      %v256 = vmul.f32 %v246, %v254
      %257 = vset.pattern.permute.xlu0 1
      %258 = vperm.xlu0 %257, %v245
      %v259 = vpop.permute.xlu0 %258
      %v261 = vunpack.c.l.s4 839922192
      %v262 = vunpack.c.0.s8 %v261
      %v263 = vperm.slane %v259, %v262
      %v265 = vadd.f32 %v256, %v263
      %267 = vst [vmem:[#allocation1] ss:$2 sm:$0xff] %v265
      %v268 = vld.sshfl [vmem:[#allocation1] sm:$0xff pattern:$0x75316420]
      %v269 = vld.sshfl [vmem:[#allocation1 + $0x8] sm:$0xff pattern:$0x75316420]
      %272 = vrot.lane.b32.xlu0 %v268, 17
      %v273 = vpop.permute.xlu0 %272
      %274 = vrot.lane.b32.xlu0 %v269, 17
      %v275 = vpop.permute.xlu0 %274
      %v276 = vlaneseq
      %v277 = vand.u32 %v276, 127
      %vm278 = vcmp.lt.s32.totalorder %v277, 17
      %v279 = vsel %vm278, %v273, %v275
      %v280 = vsel %vm278, %v275, %v273
      %v281 = vld [vmem:[%s3] ss:$8 sm:$0x3]
      %v283 = vperm.slane %v281, 0
      %v284 = vperm.slane %v281, 1
      %v287 = vmul.f32 %v280, %v283
      %v288 = vmul.f32 %v279, %v284
      %289 = vst [vmem:[#allocation2] sm:$0xf] %v287
      %290 = vst [vmem:[#allocation2 + $0x8] sm:$0xf] %v288
      %291 = vst [vmem:[#allocation1] ss:$2 sm:$0xff] %v265
      %v292 = vld.sshfl [vmem:[#allocation1] sm:$0xff pattern:$0x75316420]
      %v293 = vld.sshfl [vmem:[#allocation1 + $0x8] sm:$0xff pattern:$0x75316420]
      %296 = vrot.lane.b32.xlu0 %v292, 16
      %v297 = vpop.permute.xlu0 %296
      %298 = vrot.lane.b32.xlu0 %v293, 16
      %v299 = vpop.permute.xlu0 %298
      %vm300 = vcmp.lt.s32.totalorder %v277, 16
      %v301 = vsel %vm300, %v297, %v299
      %v302 = vsel %vm300, %v299, %v297
      %s303 = scalar_lea.vmem %s3, 1
      %v304 = vld [vmem:[%s303] ss:$8 sm:$0x3]
      %v306 = vperm.slane %v304, 0
      %v307 = vperm.slane %v304, 1
      %v310 = vmul.f32 %v302, %v306
      %v311 = vmul.f32 %v301, %v307
      %v314 = vrot.slane %v310, 4
      %v315 = vrot.slane %v311, 4
      %318 = vst [vmem:[#allocation2] sm:$0xf0] %v314
      %319 = vst [vmem:[#allocation2 + $0x8] sm:$0xf0] %v315
      %320 = vst [vmem:[#allocation1] ss:$2 sm:$0xff] %v265
      %v321 = vld.sshfl [vmem:[#allocation1] sm:$0xff pattern:$0x75316420]
      %v322 = vld.sshfl [vmem:[#allocation1 + $0x8] sm:$0xff pattern:$0x75316420]
      %325 = vrot.lane.b32.xlu0 %v321, 15
      %v326 = vpop.permute.xlu0 %325
      %327 = vrot.lane.b32.xlu0 %v322, 15
      %v328 = vpop.permute.xlu0 %327
      %vm329 = vcmp.lt.s32.totalorder %v277, 15
      %v330 = vsel %vm329, %v326, %v328
      %v331 = vsel %vm329, %v328, %v326
      %s332 = scalar_lea.vmem %s3, 2
      %v333 = vld [vmem:[%s332] ss:$8 sm:$0x3]
      %v335 = vperm.slane %v333, 0
      %v336 = vperm.slane %v333, 1
      %v339 = vmul.f32 %v331, %v335
      %v340 = vmul.f32 %v330, %v336
      %341 = vst [vmem:[#allocation2 + $0x10] sm:$0xf] %v339
      %342 = vst [vmem:[#allocation2 + $0x18] sm:$0xf] %v340
      %343 = vst [vmem:[#allocation1] ss:$2 sm:$0xff] %v265
      %v344 = vld.sshfl [vmem:[#allocation1] sm:$0xff pattern:$0x75316420]
      %v345 = vld.sshfl [vmem:[#allocation1 + $0x8] sm:$0xff pattern:$0x75316420]
      %348 = vrot.lane.b32.xlu0 %v344, 1
      %v349 = vpop.permute.xlu0 %348
      %350 = vrot.lane.b32.xlu0 %v345, 1
      %v351 = vpop.permute.xlu0 %350
      %vm352 = vcmp.lt.s32.totalorder %v277, 1
      %v353 = vsel %vm352, %v349, %v351
      %v354 = vsel %vm352, %v351, %v349
      %s355 = scalar_lea.vmem %s3, 3
      %v356 = vld [vmem:[%s355] ss:$8 sm:$0x3]
      %v358 = vperm.slane %v356, 0
      %v359 = vperm.slane %v356, 1
      %v362 = vmul.f32 %v354, %v358
      %v363 = vmul.f32 %v353, %v359
      %v366 = vrot.slane %v362, 4
      %v367 = vrot.slane %v363, 4
      %370 = vst [vmem:[#allocation2 + $0x10] sm:$0xf0] %v366
      %371 = vst [vmem:[#allocation2 + $0x18] sm:$0xf0] %v367
      %s372 = scalar_lea.vmem %s3, 4
      %v373 = vld [vmem:[%s372] ss:$8 sm:$0x3]
      %v375 = vperm.slane %v373, 0
      %v376 = vperm.slane %v373, 1
      %v377 = vrot.slane %v376, 4
      %vm378 = vcmask 1043456
      %v379 = vsel %vm378, %v375, %v377
      %v381 = vmul.f32 %v265, %v379
      %383 = vst [vmem:[#allocation1] ss:$2 sm:$0xff] %v381
      %v384 = vld.sshfl [vmem:[#allocation1] sm:$0xff pattern:$0x75316420]
      %v385 = vld.sshfl [vmem:[#allocation1 + $0x8] sm:$0xff pattern:$0x75316420]
      %388 = vst [vmem:[#allocation2 + $0x20] sm:$0xf] %v384
      %389 = vst [vmem:[#allocation2 + $0x28] sm:$0xf] %v385
      %390 = vst [vmem:[#allocation1] ss:$2 sm:$0xff] %v265
      %v391 = vld.sshfl [vmem:[#allocation1] sm:$0xff pattern:$0x75316420]
      %v392 = vld.sshfl [vmem:[#allocation1 + $0x8] sm:$0xff pattern:$0x75316420]
      %395 = vrot.lane.b32.xlu0 %v391, 127
      %v396 = vpop.permute.xlu0 %395
      %397 = vrot.lane.b32.xlu0 %v392, 127
      %v398 = vpop.permute.xlu0 %397
      %vm399 = vcmp.lt.s32.totalorder %v277, 127
      %v400 = vsel %vm399, %v396, %v398
      %v401 = vsel %vm399, %v398, %v396
      %s402 = scalar_lea.vmem %s3, 5
      %v403 = vld [vmem:[%s402] ss:$8 sm:$0x3]
      %v405 = vperm.slane %v403, 0
      %v406 = vperm.slane %v403, 1
      %v409 = vmul.f32 %v400, %v405
      %v410 = vmul.f32 %v401, %v406
      %v413 = vrot.slane %v409, 4
      %v414 = vrot.slane %v410, 4
      %417 = vst [vmem:[#allocation2 + $0x20] sm:$0xf0] %v413
      %418 = vst [vmem:[#allocation2 + $0x28] sm:$0xf0] %v414
      %419 = vst [vmem:[#allocation1] ss:$2 sm:$0xff] %v265
      %v420 = vld.sshfl [vmem:[#allocation1] sm:$0xff pattern:$0x75316420]
      %v421 = vld.sshfl [vmem:[#allocation1 + $0x8] sm:$0xff pattern:$0x75316420]
      %424 = vrot.lane.b32.xlu0 %v420, 113
      %v425 = vpop.permute.xlu0 %424
      %426 = vrot.lane.b32.xlu0 %v421, 113
      %v427 = vpop.permute.xlu0 %426
      %vm428 = vcmp.lt.s32.totalorder %v277, 113
      %v429 = vsel %vm428, %v425, %v427
      %v430 = vsel %vm428, %v427, %v425
      %s431 = scalar_lea.vmem %s3, 6
      %v432 = vld [vmem:[%s431] ss:$8 sm:$0x3]
      %v434 = vperm.slane %v432, 0
      %v435 = vperm.slane %v432, 1
      %v438 = vmul.f32 %v429, %v434
      %v439 = vmul.f32 %v430, %v435
      %440 = vst [vmem:[#allocation2 + $0x30] sm:$0xf] %v438
      %441 = vst [vmem:[#allocation2 + $0x38] sm:$0xf] %v439
      %442 = vst [vmem:[#allocation1] ss:$2 sm:$0xff] %v265
      %v443 = vld.sshfl [vmem:[#allocation1] sm:$0xff pattern:$0x75316420]
      %v444 = vld.sshfl [vmem:[#allocation1 + $0x8] sm:$0xff pattern:$0x75316420]
      %447 = vrot.lane.b32.xlu0 %v443, 112
      %v448 = vpop.permute.xlu0 %447
      %449 = vrot.lane.b32.xlu0 %v444, 112
      %v450 = vpop.permute.xlu0 %449
      %vm451 = vcmp.lt.s32.totalorder %v277, 112
      %v452 = vsel %vm451, %v448, %v450
      %v453 = vsel %vm451, %v450, %v448
      %s454 = scalar_lea.vmem %s3, 7
      %v455 = vld [vmem:[%s454] ss:$8 sm:$0x3]
      %v457 = vperm.slane %v455, 0
      %v458 = vperm.slane %v455, 1
      %v461 = vmul.f32 %v452, %v457
      %v462 = vmul.f32 %v453, %v458
      %v465 = vrot.slane %v461, 4
      %v466 = vrot.slane %v462, 4
      %469 = vst [vmem:[#allocation2 + $0x30] sm:$0xf0] %v465
      %470 = vst [vmem:[#allocation2 + $0x38] sm:$0xf0] %v466
      %471 = vst [vmem:[#allocation1] ss:$2 sm:$0xff] %v265
      %v472 = vld.sshfl [vmem:[#allocation1] sm:$0xff pattern:$0x75316420]
      %v473 = vld.sshfl [vmem:[#allocation1 + $0x8] sm:$0xff pattern:$0x75316420]
      %476 = vrot.lane.b32.xlu0 %v472, 111
      %v477 = vpop.permute.xlu0 %476
      %478 = vrot.lane.b32.xlu0 %v473, 111
      %v479 = vpop.permute.xlu0 %478
      %vm480 = vcmp.lt.s32.totalorder %v277, 111
      %v481 = vsel %vm480, %v477, %v479
      %v482 = vsel %vm480, %v479, %v477
      %s483 = scalar_lea.vmem %s3, 16
      %v484 = vld [vmem:[%s483] ss:$8 sm:$0x3]
      %v486 = vperm.slane %v484, 0
      %v487 = vperm.slane %v484, 1
      %v490 = vmul.f32 %v481, %v486
      %v491 = vmul.f32 %v482, %v487
      %492 = vst [vmem:[#allocation2 + $0x40] sm:$0xf] %v490
      %493 = vst [vmem:[#allocation2 + $0x48] sm:$0xf] %v491
      %v494 = vld [vmem:[%s1] sm:$0xf]
      %v495 = vld [vmem:[#allocation2] sm:$0xff]
      %v496 = vld [vmem:[#allocation2 + $0x8] sm:$0xff]
      %v497 = vld [vmem:[#allocation2 + $0x10] sm:$0xff]
      %v498 = vld [vmem:[#allocation2 + $0x18] sm:$0xff]
      %v499 = vld [vmem:[#allocation2 + $0x20] sm:$0xff]
      %v500 = vld [vmem:[#allocation2 + $0x28] sm:$0xff]
      %v501 = vld [vmem:[#allocation2 + $0x30] sm:$0xff]
      %v502 = vld [vmem:[#allocation2 + $0x38] sm:$0xff]
      %v503 = vld [vmem:[#allocation2 + $0x40] sm:$0xf]
      %v504 = vld [vmem:[#allocation2 + $0x48] sm:$0xf]
      %505 = vset.pattern.permute.xlu0 2
      %506 = vperm.xlu0 %505, %v245
      %v507 = vpop.permute.xlu0 %506
      %vm509 = vcmask 293888
      %v511 = vsel %vm509, %v494, 0
      %v514 = vsel %vm378, %v503, 0
      %v517 = vsel %vm378, %v504, 0
      %519 = vmatpush.msra.mxu0 0.0
      %520 = vmatpush.msra.mxu0 0.0
      %521 = vmatpush.msra.mxu0 0.0
      %522 = vmatpush.msra.mxu0 0.0
      %523 = vmatpush.msra.mxu0 0.0
      %524 = vmatpush.msra.mxu0 0.0
      %525 = vmatpush.msra.mxu0 0.0
      %526 = vmatpush.msra.mxu0 0.0
      %527 = vmatpush.msra.mxu0 0.0
      %528 = vmatpush.msra.mxu0 0.0
      %529 = vmatpush.msra.mxu0 0.0
      %530 = vmatpush.msra.mxu0 %v514
      %531 = vmatpush.msra.mxu0 %v501
      %532 = vmatpush.msra.mxu0 %v499
      %533 = vmatpush.msra.mxu0 %v497
      %534 = vmatpush.msra.mxu0 %v495
      %535 = vmatmul.f32.gmra.mxu0 %v511
      %v536 = vpop.f32.mrf.mxu0
      %v537 = vadd.f32 %v507, %v536
      %538 = vdwg.mxu0
      %539 = vmatpush.msra.mxu0 0.0
      %540 = vmatpush.msra.mxu0 0.0
      %541 = vmatpush.msra.mxu0 0.0
      %542 = vmatpush.msra.mxu0 0.0
      %543 = vmatpush.msra.mxu0 0.0
      %544 = vmatpush.msra.mxu0 0.0
      %545 = vmatpush.msra.mxu0 0.0
      %546 = vmatpush.msra.mxu0 0.0
      %547 = vmatpush.msra.mxu0 0.0
      %548 = vmatpush.msra.mxu0 0.0
      %549 = vmatpush.msra.mxu0 0.0
      %550 = vmatpush.msra.mxu0 %v517
      %551 = vmatpush.msra.mxu0 %v502
      %552 = vmatpush.msra.mxu0 %v500
      %553 = vmatpush.msra.mxu0 %v498
      %554 = vmatpush.msra.mxu0 %v496
      %555 = vmatmul.f32.gmra.mxu0 %v511
      %v556 = vpop.f32.mrf.mxu0
      %v557 = vadd.f32 %v507, %v556
      %558 = vdwg.mxu0
      %v559 = vmax.f32 %v537, 0.0
      %v560 = vmax.f32 %v557, 0.0
      %v561 = vld [vmem:[%s239] sm:$0xff]
      %563 = vst [vmem:[#allocation1] ss:$2 sm:$0xff] %v561
      %v564 = vld.sshfl [vmem:[#allocation1] sm:$0xff pattern:$0x75316420]
      %v565 = vld.sshfl [vmem:[#allocation1 + $0x8] sm:$0xff pattern:$0x75316420]
      %v568 = vadd.f32 %v559, %v564
      %v569 = vadd.f32 %v560, %v565
      %v572 = vrot.slane %v569, 4
      %v573 = vsel %vm378, %v568, %v572
      %575 = vst [vmem:[%s244] sm:$0xff] %v573
      %p576 = scmp.lt.s32.totalorder %s16, 1
      %s577 = scalar_select %p576, %s16, 1
      %s578 = smul.addr %s577, 2
      %s579 = smul.addr %s578, 4
      %s580 = scalar_lea.vmem %s5, %s579
      // Predicated region
      $region41: #{resblock_forward.5} parent=39 // pred_check
        %p581 = pneg %p149
      $region42: #{resblock_forward.5} parent=39 // pred_check_branch
        %583 = sbr.rel (%p581) target = $region44
      $region43: #{resblock_forward.5} parent=39 // pred_region
        _
      $region44: #{resblock_forward.5} parent=39 // pred_fallthru
        _
    $region40: #{resblock_forward.5} parent=5 // pred_fallthru
      _
    %p584 = scmp.le.s32.totalorder 2, %s11
    // Predicated region
    $region45: #{resblock_forward.5} parent=5 // pred_check
      %p585 = pneg %p584
    $region46: #{resblock_forward.5} parent=5 // pred_check_branch
      %587 = sbr.rel (%p585) target = $region48
    $region47: #{resblock_forward.5} parent=5 // pred_region
      %s588 = ssub.s32 %s11, 2
      // Predicated region
      $region49: #{resblock_forward.5} parent=47 // pred_check
        %p589 = pneg %p155
      $region50: #{resblock_forward.5} parent=47 // pred_check_branch
        %591 = sbr.rel (%p589) target = $region52
      $region51: #{resblock_forward.5} parent=47 // pred_region
        %p592 = scmp.lt.s32.totalorder %s17, 1
        %s593 = scalar_select %p592, %s17, 1
        %s594 = smul.addr %s593, 2
        %s595 = smul.addr %s594, 4
        %s596 = scalar_lea.vmem %s5, %s595
      $region52: #{resblock_forward.5} parent=47 // pred_fallthru
        _
    $region48: #{resblock_forward.5} parent=5 // pred_fallthru
      _
  $region6: #{resblock_forward.5} parent=0 // loop_footer
    %s15 = sadd.s32 1, %s11
  $region7: #{resblock_forward.5} parent=0 // loop_footer_branch
    %10 = sbr.rel target = $region3
  $region8: #{resblock_forward.5} parent=0 // loop_exit
    _

// kernel: resblock_forward.4
$region0: #{resblock_forward.4}
  #allocation0 [shape = 'u32[]', space=smem, size = 0x4, offset = 0x4, fixed_abs, tag = 'smem constant byte address 0x4 - core index']
  #allocation1 [shape = 'u32[72,128]{1,0:T(1,128)}', space=vmem, size = 0x9000, scoped, tag = 'internal scratch']
  #allocation2 [shape = 'f32[36,256]{1,0:T(8,128)}', space=vmem, size = 0xa000, scoped, tag = 'scratch operand']
  %s0 = inlined_call_operand.vmem [shape: f32[2,4,256], index: 0, kind: input, shape index: {}]
  %s1 = inlined_call_operand.vmem [shape: f32[4,36], index: 1, kind: input, shape index: {}]
  %s2 = inlined_call_operand.vmem [shape: f32[4,3], index: 2, kind: input, shape index: {}]
  %s3 = inlined_call_operand.vmem [shape: f32[9,256], index: 3, kind: input, shape index: {}]
  %s4 = inlined_call_operand.vmem [shape: f32[2,4,256], index: 4, kind: output, shape index: {0}]
  %s5 = inlined_call_operand.vmem [shape: f32[2,4,2], index: 5, kind: output, shape index: {1}]
  %6 = xla_tuple %s4, %s5
  %s7 = sld [smem:[#allocation0]]
  $region57: #{resblock_forward.4} parent=0
    _
  %s9 = ssub.s32 1, %s7
  %s10 = scalar_select 0, %s9, %s7
  loop: start=0, step=1, limit=4
  $region2: #{resblock_forward.4} parent=0 // loop_pre_header
    _
  $region3: #{resblock_forward.4} parent=0 // loop_header
    %s12 = sphi 0, %s16
    %p13 = scmp.ge.s32.totalorder %s12, 4
    %s22 = sphi 0, %s24
    %s25 = sphi 0, %s22
    %s26 = sphi 0, %s25
    %s42 = sphi 0, %s26
    %s46 = sphi 0, %s46
    %s48 = sphi 0, %s46
    %s49 = sphi 0, %s48
    %s63 = sphi 0, %s49
    %s67 = sphi 0, %s67
    %s69 = sphi 0, %s67
    %s70 = sphi 0, %s69
    %s84 = sphi 0, %s70
    %s88 = sphi 0, %s88
    %s90 = sphi 0, %s88
    %s91 = sphi 0, %s90
    %s105 = sphi 0, %s91
    %s111 = sphi 0, %s113
    %s114 = sphi 0, %s111
    %s115 = sphi 0, %s114
    %s131 = sphi 0, %s115
    %s137 = sphi 0, %s139
    %s140 = sphi 0, %s137
    %s141 = sphi 0, %s140
    %s157 = sphi 0, %s141
  $region4: #{resblock_forward.4} parent=0 // loop_header_branch
    %15 = sbr.rel (%p13) target = $region8
  $region5: #{resblock_forward.4} parent=0 // loop_body
    %s17 = ssub.s32 %s12, 1
    %s18 = ssub.s32 %s12, 2
    %s19 = sadd.s32 %s12, 1
    %s20 = ssub.s32 %s12, %s19
    %p21 = scmp.eq.s32.totalorder %s20, 0
    %s23 = sadd.s32 %s22, 1
    %s24 = scalar_select %p21, %s22, %s23
    %p27 = pneg %p21
    %p28 = scmp.eq.s32.totalorder %s12, 1
    %p29 = por %p27, %p28
    %p30 = scmp.ne.s32.totalorder %s22, %s25
    %p31 = scmp.eq.s32.totalorder %s12, 0
    %p32 = por %p30, %p31
    %p33 = scmp.ne.s32.totalorder %s22, %s25
    %p34 = scmp.eq.s32.totalorder %s17, 1
    %p35 = por %p33, %p34
    %p36 = scmp.ne.s32.totalorder %s25, %s26
    %p37 = scmp.eq.s32.totalorder %s17, 0
    %p38 = por %p36, %p37
    %p39 = scmp.ne.s32.totalorder %s25, %s26
    %p40 = scmp.eq.s32.totalorder %s18, 1
    %p41 = por %p39, %p40
    %p43 = scmp.ne.s32.totalorder %s26, %s42
    %p44 = scmp.eq.s32.totalorder %s18, 0
    %p45 = por %p43, %p44
    %s47 = sadd.s32 %s46, 1
    %p50 = scmp.eq.s32.totalorder %s12, 1
    %p51 = scmp.ne.s32.totalorder %s46, %s48
    %p52 = scmp.eq.s32.totalorder %s12, 0
    %p53 = por %p51, %p52
    %p54 = scmp.ne.s32.totalorder %s46, %s48
    %p55 = scmp.eq.s32.totalorder %s17, 1
    %p56 = por %p54, %p55
    %p57 = scmp.ne.s32.totalorder %s48, %s49
    %p58 = scmp.eq.s32.totalorder %s17, 0
    %p59 = por %p57, %p58
    %p60 = scmp.ne.s32.totalorder %s48, %s49
    %p61 = scmp.eq.s32.totalorder %s18, 1
    %p62 = por %p60, %p61
    %p64 = scmp.ne.s32.totalorder %s49, %s63
    %p65 = scmp.eq.s32.totalorder %s18, 0
    %p66 = por %p64, %p65
    %s68 = sadd.s32 %s67, 1
    %p71 = scmp.eq.s32.totalorder %s12, 1
    %p72 = scmp.ne.s32.totalorder %s67, %s69
    %p73 = scmp.eq.s32.totalorder %s12, 0
    %p74 = por %p72, %p73
    %p75 = scmp.ne.s32.totalorder %s67, %s69
    %p76 = scmp.eq.s32.totalorder %s17, 1
    %p77 = por %p75, %p76
    %p78 = scmp.ne.s32.totalorder %s69, %s70
    %p79 = scmp.eq.s32.totalorder %s17, 0
    %p80 = por %p78, %p79
    %p81 = scmp.ne.s32.totalorder %s69, %s70
    %p82 = scmp.eq.s32.totalorder %s18, 1
    %p83 = por %p81, %p82
    %p85 = scmp.ne.s32.totalorder %s70, %s84
    %p86 = scmp.eq.s32.totalorder %s18, 0
    %p87 = por %p85, %p86
    %s89 = sadd.s32 %s88, 1
    %p92 = scmp.eq.s32.totalorder %s12, 1
    %p93 = scmp.ne.s32.totalorder %s88, %s90
    %p94 = scmp.eq.s32.totalorder %s12, 0
    %p95 = por %p93, %p94
    %p96 = scmp.ne.s32.totalorder %s88, %s90
    %p97 = scmp.eq.s32.totalorder %s17, 1
    %p98 = por %p96, %p97
    %p99 = scmp.ne.s32.totalorder %s90, %s91
    %p100 = scmp.eq.s32.totalorder %s17, 0
    %p101 = por %p99, %p100
    %p102 = scmp.ne.s32.totalorder %s90, %s91
    %p103 = scmp.eq.s32.totalorder %s18, 1
    %p104 = por %p102, %p103
    %p106 = scmp.ne.s32.totalorder %s91, %s105
    %p107 = scmp.eq.s32.totalorder %s18, 0
    %p108 = por %p106, %p107
    %s109 = ssub.s32 %s12, %s19
    %p110 = scmp.eq.s32.totalorder %s109, 0
    %s112 = sadd.s32 %s111, 1
    %s113 = scalar_select %p110, %s111, %s112
    %p116 = pneg %p110
    %p117 = scmp.eq.s32.totalorder %s12, 1
    %p118 = por %p116, %p117
    %p119 = scmp.ne.s32.totalorder %s111, %s114
    %p120 = scmp.eq.s32.totalorder %s12, 0
    %p121 = por %p119, %p120
    %p122 = scmp.ne.s32.totalorder %s111, %s114
    %p123 = scmp.eq.s32.totalorder %s17, 1
    %p124 = por %p122, %p123
    %p125 = scmp.ne.s32.totalorder %s114, %s115
    %p126 = scmp.eq.s32.totalorder %s17, 0
    %p127 = por %p125, %p126
    %p128 = scmp.ne.s32.totalorder %s114, %s115
    %p129 = scmp.eq.s32.totalorder %s18, 1
    %p130 = por %p128, %p129
    %p132 = scmp.ne.s32.totalorder %s115, %s131
    %p133 = scmp.eq.s32.totalorder %s18, 0
    %p134 = por %p132, %p133
    %s135 = ssub.s32 %s12, %s19
    %p136 = scmp.eq.s32.totalorder %s135, 0
    %s138 = sadd.s32 %s137, 1
    %s139 = scalar_select %p136, %s137, %s138
    %p142 = pneg %p136
    %p143 = scmp.eq.s32.totalorder %s12, 1
    %p144 = por %p142, %p143
    %p145 = scmp.ne.s32.totalorder %s137, %s140
    %p146 = scmp.eq.s32.totalorder %s12, 0
    %p147 = por %p145, %p146
    %p148 = scmp.ne.s32.totalorder %s137, %s140
    %p149 = scmp.eq.s32.totalorder %s17, 1
    %p150 = por %p148, %p149
    %p151 = scmp.ne.s32.totalorder %s140, %s141
    %p152 = scmp.eq.s32.totalorder %s17, 0
    %p153 = por %p151, %p152
    %p154 = scmp.ne.s32.totalorder %s140, %s141
    %p155 = scmp.eq.s32.totalorder %s18, 1
    %p156 = por %p154, %p155
    %p158 = scmp.ne.s32.totalorder %s141, %s157
    %p159 = scmp.eq.s32.totalorder %s18, 0
    %p160 = por %p158, %p159
    %p161 = scmp.le.s32.totalorder 1, %s12
    %p162 = scmp.lt.s32.totalorder %s12, 3
    %p163 = pnand %p161, %p162
    %p164 = pneg %p163
    // Predicated region
    $region9: #{resblock_forward.4} parent=5 // pred_check
      _
    $region10: #{resblock_forward.4} parent=5 // pred_check_branch
      %166 = sbr.rel (%p163) target = $region12
    $region11: #{resblock_forward.4} parent=5 // pred_region
      %s167 = ssub.s32 %s12, 1
      // Predicated region
      $region13: #{resblock_forward.4} parent=11 // pred_check
        %p168 = pneg %p59
      $region14: #{resblock_forward.4} parent=11 // pred_check_branch
        %170 = sbr.rel (%p168) target = $region16
      $region15: #{resblock_forward.4} parent=11 // pred_region
        _
      $region16: #{resblock_forward.4} parent=11 // pred_fallthru
        _
      // Predicated region
      $region17: #{resblock_forward.4} parent=11 // pred_check
        %p171 = pneg %p80
      $region18: #{resblock_forward.4} parent=11 // pred_check_branch
        %173 = sbr.rel (%p171) target = $region20
      $region19: #{resblock_forward.4} parent=11 // pred_region
        _
      $region20: #{resblock_forward.4} parent=11 // pred_fallthru
        _
      // Predicated region
      $region21: #{resblock_forward.4} parent=11 // pred_check
        %p174 = pneg %p101
      $region22: #{resblock_forward.4} parent=11 // pred_check_branch
        %176 = sbr.rel (%p174) target = $region24
      $region23: #{resblock_forward.4} parent=11 // pred_region
        _
      $region24: #{resblock_forward.4} parent=11 // pred_fallthru
        _
    $region12: #{resblock_forward.4} parent=5 // pred_fallthru
      _
    %p177 = scmp.lt.s32.totalorder %s12, 2
    // Predicated region
    $region25: #{resblock_forward.4} parent=5 // pred_check
      %p178 = pneg %p177
    $region26: #{resblock_forward.4} parent=5 // pred_check_branch
      %180 = sbr.rel (%p178) target = $region28
    $region27: #{resblock_forward.4} parent=5 // pred_region
      // Predicated region
      $region29: #{resblock_forward.4} parent=27 // pred_check
        %p181 = pneg %p32
      $region30: #{resblock_forward.4} parent=27 // pred_check_branch
        %183 = sbr.rel (%p181) target = $region32
      $region31: #{resblock_forward.4} parent=27 // pred_region
        %p184 = scmp.lt.s32.totalorder %s12, 1
        %s185 = scalar_select %p184, %s12, 1
        %s186 = smul.addr %s185, 2
        %s187 = smul.addr %s186, 4
        %s188 = scalar_lea.vmem %s0, %s187
      $region32: #{resblock_forward.4} parent=27 // pred_fallthru
        _
    $region28: #{resblock_forward.4} parent=5 // pred_fallthru
      _
    %p189 = scmp.le.s32.totalorder 1, %s12
    %p190 = scmp.lt.s32.totalorder %s12, 3
    %p191 = pnand %p189, %p190
    %p192 = pneg %p191
    // Predicated region
    $region33: #{resblock_forward.4} parent=5 // pred_check
      _
    $region34: #{resblock_forward.4} parent=5 // pred_check_branch
      %194 = sbr.rel (%p191) target = $region36
    $region35: #{resblock_forward.4} parent=5 // pred_region
      %s195 = ssub.s32 %s12, 1
      %p196 = scmp.lt.s32.totalorder %s17, 1
      %s197 = scalar_select %p196, %s17, 1
      %s198 = smul.addr %s197, 2
      %s199 = smul.addr %s198, 4
      %s200 = scalar_lea.vmem %s0, %s199
      %p201 = pneg %p38
      %p202 = pneg %p35
      %p203 = pneg %p59
      %p204 = pneg %p56
      %p205 = pneg %p80
      %p206 = pneg %p77
      %p207 = pneg %p101
      %p208 = pneg %p98
      %p209 = pneg %p127
      %p210 = pneg %p124
      %p211 = scmp.lt.s32.totalorder %s17, 1
      %s212 = scalar_select %p211, %s17, 1
      %s213 = smul.addr %s212, 2
      %s214 = smul.addr %s213, 4
      %s215 = scalar_lea.vmem %s4, %s214
      %p216 = pneg %p153
      %p217 = pneg %p150
      %p218 = scmp.lt.s32.totalorder %s17, 1
      %s219 = scalar_select %p218, %s17, 1
      %s220 = smul.addr %s219, 4
      %s221 = scalar_lea.vmem %s5, %s220
      %p222 = scmp.lt.s32.totalorder %s17, 1
      %s223 = scalar_select %p222, %s17, 1
      %s224 = smul.addr %s223, 2
      %s225 = smul.addr %s224, 4
      %s226 = scalar_lea.vmem %s0, %s225
      %p227 = scmp.lt.s32.totalorder %s17, 1
      %s228 = scalar_select %p227, %s17, 1
      %s229 = smul.addr %s228, 2
      %s230 = smul.addr %s229, 4
      %s231 = scalar_lea.vmem %s4, %s230
      %p232 = scmp.lt.s32.totalorder %s17, 1
      %s233 = scalar_select %p232, %s17, 1
      %s234 = smul.addr %s233, 4
      %s235 = scalar_lea.vmem %s5, %s234
      %v236 = vld [vmem:[%s2] sm:$0xf]
      %v237 = vld [vmem:[%s226] sm:$0xff]
      %239 = vset.pattern.permute.xlu0 0
      %240 = vperm.xlu0 %239, %v236
      %v241 = vpop.permute.xlu0 %240
      %v243 = vunpack.c.l.s4 839922192
      %v244 = vunpack.c.0.s8 %v243
      %v245 = vperm.slane %v241, %v244
      %v247 = vmul.f32 %v237, %v245
      %248 = vset.pattern.permute.xlu0 1
      %249 = vperm.xlu0 %248, %v236
      %v250 = vpop.permute.xlu0 %249
      %v252 = vunpack.c.l.s4 839922192
      %v253 = vunpack.c.0.s8 %v252
      %v254 = vperm.slane %v250, %v253
      %v256 = vadd.f32 %v247, %v254
      %258 = vst [vmem:[#allocation1] ss:$2 sm:$0xff] %v256
      %v259 = vld.sshfl [vmem:[#allocation1] sm:$0xff pattern:$0x75316420]
      %v260 = vld.sshfl [vmem:[#allocation1 + $0x8] sm:$0xff pattern:$0x75316420]
      %263 = vrot.lane.b32.xlu0 %v259, 17
      %v264 = vpop.permute.xlu0 %263
      %265 = vrot.lane.b32.xlu0 %v260, 17
      %v266 = vpop.permute.xlu0 %265
      %v267 = vlaneseq
      %v268 = vand.u32 %v267, 127
      %vm269 = vcmp.lt.s32.totalorder %v268, 17
      %v270 = vsel %vm269, %v264, %v266
      %v271 = vsel %vm269, %v266, %v264
      %v272 = vld [vmem:[%s3] ss:$8 sm:$0x3]
      %v274 = vperm.slane %v272, 0
      %v275 = vperm.slane %v272, 1
      %v278 = vmul.f32 %v271, %v274
      %v279 = vmul.f32 %v270, %v275
      %280 = vst [vmem:[#allocation2] sm:$0xf] %v278
      %281 = vst [vmem:[#allocation2 + $0x8] sm:$0xf] %v279
      %282 = vst [vmem:[#allocation1] ss:$2 sm:$0xff] %v256
      %v283 = vld.sshfl [vmem:[#allocation1] sm:$0xff pattern:$0x75316420]
      %v284 = vld.sshfl [vmem:[#allocation1 + $0x8] sm:$0xff pattern:$0x75316420]
      %287 = vrot.lane.b32.xlu0 %v283, 16
      %v288 = vpop.permute.xlu0 %287
      %289 = vrot.lane.b32.xlu0 %v284, 16
      %v290 = vpop.permute.xlu0 %289
      %vm291 = vcmp.lt.s32.totalorder %v268, 16
      %v292 = vsel %vm291, %v288, %v290
      %v293 = vsel %vm291, %v290, %v288
      %s294 = scalar_lea.vmem %s3, 1
      %v295 = vld [vmem:[%s294] ss:$8 sm:$0x3]
      %v297 = vperm.slane %v295, 0
      %v298 = vperm.slane %v295, 1
      %v301 = vmul.f32 %v293, %v297
      %v302 = vmul.f32 %v292, %v298
      %v305 = vrot.slane %v301, 4
      %v306 = vrot.slane %v302, 4
      %309 = vst [vmem:[#allocation2] sm:$0xf0] %v305
      %310 = vst [vmem:[#allocation2 + $0x8] sm:$0xf0] %v306
      %311 = vst [vmem:[#allocation1] ss:$2 sm:$0xff] %v256
      %v312 = vld.sshfl [vmem:[#allocation1] sm:$0xff pattern:$0x75316420]
      %v313 = vld.sshfl [vmem:[#allocation1 + $0x8] sm:$0xff pattern:$0x75316420]
      %316 = vrot.lane.b32.xlu0 %v312, 15
      %v317 = vpop.permute.xlu0 %316
      %318 = vrot.lane.b32.xlu0 %v313, 15
      %v319 = vpop.permute.xlu0 %318
      %vm320 = vcmp.lt.s32.totalorder %v268, 15
      %v321 = vsel %vm320, %v317, %v319
      %v322 = vsel %vm320, %v319, %v317
      %s323 = scalar_lea.vmem %s3, 2
      %v324 = vld [vmem:[%s323] ss:$8 sm:$0x3]
      %v326 = vperm.slane %v324, 0
      %v327 = vperm.slane %v324, 1
      %v330 = vmul.f32 %v322, %v326
      %v331 = vmul.f32 %v321, %v327
      %332 = vst [vmem:[#allocation2 + $0x10] sm:$0xf] %v330
      %333 = vst [vmem:[#allocation2 + $0x18] sm:$0xf] %v331
      %334 = vst [vmem:[#allocation1] ss:$2 sm:$0xff] %v256
      %v335 = vld.sshfl [vmem:[#allocation1] sm:$0xff pattern:$0x75316420]
      %v336 = vld.sshfl [vmem:[#allocation1 + $0x8] sm:$0xff pattern:$0x75316420]
      %339 = vrot.lane.b32.xlu0 %v335, 1
      %v340 = vpop.permute.xlu0 %339
      %341 = vrot.lane.b32.xlu0 %v336, 1
      %v342 = vpop.permute.xlu0 %341
      %vm343 = vcmp.lt.s32.totalorder %v268, 1
      %v344 = vsel %vm343, %v340, %v342
      %v345 = vsel %vm343, %v342, %v340
      %s346 = scalar_lea.vmem %s3, 3
      %v347 = vld [vmem:[%s346] ss:$8 sm:$0x3]
      %v349 = vperm.slane %v347, 0
      %v350 = vperm.slane %v347, 1
      %v353 = vmul.f32 %v345, %v349
      %v354 = vmul.f32 %v344, %v350
      %v357 = vrot.slane %v353, 4
      %v358 = vrot.slane %v354, 4
      %361 = vst [vmem:[#allocation2 + $0x10] sm:$0xf0] %v357
      %362 = vst [vmem:[#allocation2 + $0x18] sm:$0xf0] %v358
      %s363 = scalar_lea.vmem %s3, 4
      %v364 = vld [vmem:[%s363] ss:$8 sm:$0x3]
      %v366 = vperm.slane %v364, 0
      %v367 = vperm.slane %v364, 1
      %v368 = vrot.slane %v367, 4
      %vm369 = vcmask 1043456
      %v370 = vsel %vm369, %v366, %v368
      %v372 = vmul.f32 %v256, %v370
      %374 = vst [vmem:[#allocation1] ss:$2 sm:$0xff] %v372
      %v375 = vld.sshfl [vmem:[#allocation1] sm:$0xff pattern:$0x75316420]
      %v376 = vld.sshfl [vmem:[#allocation1 + $0x8] sm:$0xff pattern:$0x75316420]
      %379 = vst [vmem:[#allocation2 + $0x20] sm:$0xf] %v375
      %380 = vst [vmem:[#allocation2 + $0x28] sm:$0xf] %v376
      %381 = vst [vmem:[#allocation1] ss:$2 sm:$0xff] %v256
      %v382 = vld.sshfl [vmem:[#allocation1] sm:$0xff pattern:$0x75316420]
      %v383 = vld.sshfl [vmem:[#allocation1 + $0x8] sm:$0xff pattern:$0x75316420]
      %386 = vrot.lane.b32.xlu0 %v382, 127
      %v387 = vpop.permute.xlu0 %386
      %388 = vrot.lane.b32.xlu0 %v383, 127
      %v389 = vpop.permute.xlu0 %388
      %vm390 = vcmp.lt.s32.totalorder %v268, 127
      %v391 = vsel %vm390, %v387, %v389
      %v392 = vsel %vm390, %v389, %v387
      %s393 = scalar_lea.vmem %s3, 5
      %v394 = vld [vmem:[%s393] ss:$8 sm:$0x3]
      %v396 = vperm.slane %v394, 0
      %v397 = vperm.slane %v394, 1
      %v400 = vmul.f32 %v391, %v396
      %v401 = vmul.f32 %v392, %v397
      %v404 = vrot.slane %v400, 4
      %v405 = vrot.slane %v401, 4
      %408 = vst [vmem:[#allocation2 + $0x20] sm:$0xf0] %v404
      %409 = vst [vmem:[#allocation2 + $0x28] sm:$0xf0] %v405
      %410 = vst [vmem:[#allocation1] ss:$2 sm:$0xff] %v256
      %v411 = vld.sshfl [vmem:[#allocation1] sm:$0xff pattern:$0x75316420]
      %v412 = vld.sshfl [vmem:[#allocation1 + $0x8] sm:$0xff pattern:$0x75316420]
      %415 = vrot.lane.b32.xlu0 %v411, 113
      %v416 = vpop.permute.xlu0 %415
      %417 = vrot.lane.b32.xlu0 %v412, 113
      %v418 = vpop.permute.xlu0 %417
      %vm419 = vcmp.lt.s32.totalorder %v268, 113
      %v420 = vsel %vm419, %v416, %v418
      %v421 = vsel %vm419, %v418, %v416
      %s422 = scalar_lea.vmem %s3, 6
      %v423 = vld [vmem:[%s422] ss:$8 sm:$0x3]
      %v425 = vperm.slane %v423, 0
      %v426 = vperm.slane %v423, 1
      %v429 = vmul.f32 %v420, %v425
      %v430 = vmul.f32 %v421, %v426
      %431 = vst [vmem:[#allocation2 + $0x30] sm:$0xf] %v429
      %432 = vst [vmem:[#allocation2 + $0x38] sm:$0xf] %v430
      %433 = vst [vmem:[#allocation1] ss:$2 sm:$0xff] %v256
      %v434 = vld.sshfl [vmem:[#allocation1] sm:$0xff pattern:$0x75316420]
      %v435 = vld.sshfl [vmem:[#allocation1 + $0x8] sm:$0xff pattern:$0x75316420]
      %438 = vrot.lane.b32.xlu0 %v434, 112
      %v439 = vpop.permute.xlu0 %438
      %440 = vrot.lane.b32.xlu0 %v435, 112
      %v441 = vpop.permute.xlu0 %440
      %vm442 = vcmp.lt.s32.totalorder %v268, 112
      %v443 = vsel %vm442, %v439, %v441
      %v444 = vsel %vm442, %v441, %v439
      %s445 = scalar_lea.vmem %s3, 7
      %v446 = vld [vmem:[%s445] ss:$8 sm:$0x3]
      %v448 = vperm.slane %v446, 0
      %v449 = vperm.slane %v446, 1
      %v452 = vmul.f32 %v443, %v448
      %v453 = vmul.f32 %v444, %v449
      %v456 = vrot.slane %v452, 4
      %v457 = vrot.slane %v453, 4
      %460 = vst [vmem:[#allocation2 + $0x30] sm:$0xf0] %v456
      %461 = vst [vmem:[#allocation2 + $0x38] sm:$0xf0] %v457
      %462 = vst [vmem:[#allocation1] ss:$2 sm:$0xff] %v256
      %v463 = vld.sshfl [vmem:[#allocation1] sm:$0xff pattern:$0x75316420]
      %v464 = vld.sshfl [vmem:[#allocation1 + $0x8] sm:$0xff pattern:$0x75316420]
      %467 = vrot.lane.b32.xlu0 %v463, 111
      %v468 = vpop.permute.xlu0 %467
      %469 = vrot.lane.b32.xlu0 %v464, 111
      %v470 = vpop.permute.xlu0 %469
      %vm471 = vcmp.lt.s32.totalorder %v268, 111
      %v472 = vsel %vm471, %v468, %v470
      %v473 = vsel %vm471, %v470, %v468
      %s474 = scalar_lea.vmem %s3, 16
      %v475 = vld [vmem:[%s474] ss:$8 sm:$0x3]
      %v477 = vperm.slane %v475, 0
      %v478 = vperm.slane %v475, 1
      %v481 = vmul.f32 %v472, %v477
      %v482 = vmul.f32 %v473, %v478
      %483 = vst [vmem:[#allocation2 + $0x40] sm:$0xf] %v481
      %484 = vst [vmem:[#allocation2 + $0x48] sm:$0xf] %v482
      %v485 = vld [vmem:[%s1] sm:$0xf]
      %v486 = vld [vmem:[#allocation2] sm:$0xff]
      %v487 = vld [vmem:[#allocation2 + $0x8] sm:$0xff]
      %v488 = vld [vmem:[#allocation2 + $0x10] sm:$0xff]
      %v489 = vld [vmem:[#allocation2 + $0x18] sm:$0xff]
      %v490 = vld [vmem:[#allocation2 + $0x20] sm:$0xff]
      %v491 = vld [vmem:[#allocation2 + $0x28] sm:$0xff]
      %v492 = vld [vmem:[#allocation2 + $0x30] sm:$0xff]
      %v493 = vld [vmem:[#allocation2 + $0x38] sm:$0xff]
      %v494 = vld [vmem:[#allocation2 + $0x40] sm:$0xf]
      %v495 = vld [vmem:[#allocation2 + $0x48] sm:$0xf]
      %496 = vset.pattern.permute.xlu0 2
      %497 = vperm.xlu0 %496, %v236
      %v498 = vpop.permute.xlu0 %497
      %vm500 = vcmask 293888
      %v502 = vsel %vm500, %v485, 0
      %v505 = vsel %vm369, %v494, 0
      %v508 = vsel %vm369, %v495, 0
      %510 = vmatpush.msra.mxu0 0.0
      %511 = vmatpush.msra.mxu0 0.0
      %512 = vmatpush.msra.mxu0 0.0
      %513 = vmatpush.msra.mxu0 0.0
      %514 = vmatpush.msra.mxu0 0.0
      %515 = vmatpush.msra.mxu0 0.0
      %516 = vmatpush.msra.mxu0 0.0
      %517 = vmatpush.msra.mxu0 0.0
      %518 = vmatpush.msra.mxu0 0.0
      %519 = vmatpush.msra.mxu0 0.0
      %520 = vmatpush.msra.mxu0 0.0
      %521 = vmatpush.msra.mxu0 %v505
      %522 = vmatpush.msra.mxu0 %v492
      %523 = vmatpush.msra.mxu0 %v490
      %524 = vmatpush.msra.mxu0 %v488
      %525 = vmatpush.msra.mxu0 %v486
      %526 = vmatmul.f32.gmra.mxu0 %v502
      %v527 = vpop.f32.mrf.mxu0
      %v528 = vadd.f32 %v498, %v527
      %529 = vdwg.mxu0
      %530 = vmatpush.msra.mxu0 0.0
      %531 = vmatpush.msra.mxu0 0.0
      %532 = vmatpush.msra.mxu0 0.0
      %533 = vmatpush.msra.mxu0 0.0
      %534 = vmatpush.msra.mxu0 0.0
      %535 = vmatpush.msra.mxu0 0.0
      %536 = vmatpush.msra.mxu0 0.0
      %537 = vmatpush.msra.mxu0 0.0
      %538 = vmatpush.msra.mxu0 0.0
      %539 = vmatpush.msra.mxu0 0.0
      %540 = vmatpush.msra.mxu0 0.0
      %541 = vmatpush.msra.mxu0 %v508
      %542 = vmatpush.msra.mxu0 %v493
      %543 = vmatpush.msra.mxu0 %v491
      %544 = vmatpush.msra.mxu0 %v489
      %545 = vmatpush.msra.mxu0 %v487
      %546 = vmatmul.f32.gmra.mxu0 %v502
      %v547 = vpop.f32.mrf.mxu0
      %v548 = vadd.f32 %v498, %v547
      %549 = vdwg.mxu0
      %v550 = vmax.f32 %v528, 0.0
      %v551 = vmax.f32 %v548, 0.0
      %v552 = vsel %vm369, %v550, 0.0
      %v553 = vsel %vm369, %v551, 0.0
      %v554 = vadd.f32 %v552, %v553
      %555 = vadd.xlane.f32.xlu0 %v554
      %v556 = vpop.xlane.xlu0 %555
      %v557 = vmul.f32 %v550, %v550
      %v558 = vmul.f32 %v551, %v551
      %v559 = vsel %vm369, %v557, 0.0
      %v560 = vsel %vm369, %v558, 0.0
      %v561 = vadd.f32 %v559, %v560
      %562 = vadd.xlane.f32.xlu0 %v561
      %v563 = vpop.xlane.xlu0 %562
      %vm564 = vcmask 7168
      %v565 = vsel %vm564, %v556, %v563
      %vm566 = vcmask 11264
      %567 = vst.msk [vmem:[%s235] sm:$0xf] %vm566, %v565
      %v570 = vrot.slane %v551, 4
      %v571 = vsel %vm369, %v550, %v570
      %573 = vst [vmem:[%s231] sm:$0xff] %v571
      %p574 = scmp.lt.s32.totalorder %s17, 1
      %s575 = scalar_select %p574, %s17, 1
      %s576 = smul.addr %s575, 2
      %s577 = smul.addr %s576, 4
      %s578 = scalar_lea.vmem %s4, %s577
      %p579 = scmp.lt.s32.totalorder %s17, 1
      %s580 = scalar_select %p579, %s17, 1
      %s581 = smul.addr %s580, 4
      %s582 = scalar_lea.vmem %s5, %s581
      // Predicated region
      $region37: #{resblock_forward.4} parent=35 // pred_check
        %p583 = pneg %p124
      $region38: #{resblock_forward.4} parent=35 // pred_check_branch
        %585 = sbr.rel (%p583) target = $region40
      $region39: #{resblock_forward.4} parent=35 // pred_region
        _
      $region40: #{resblock_forward.4} parent=35 // pred_fallthru
        _
      // Predicated region
      $region41: #{resblock_forward.4} parent=35 // pred_check
        %p586 = pneg %p150
      $region42: #{resblock_forward.4} parent=35 // pred_check_branch
        %588 = sbr.rel (%p586) target = $region44
      $region43: #{resblock_forward.4} parent=35 // pred_region
        _
      $region44: #{resblock_forward.4} parent=35 // pred_fallthru
        _
    $region36: #{resblock_forward.4} parent=5 // pred_fallthru
      _
    %p589 = scmp.le.s32.totalorder 2, %s12
    // Predicated region
    $region45: #{resblock_forward.4} parent=5 // pred_check
      %p590 = pneg %p589
    $region46: #{resblock_forward.4} parent=5 // pred_check_branch
      %592 = sbr.rel (%p590) target = $region48
    $region47: #{resblock_forward.4} parent=5 // pred_region
      %s593 = ssub.s32 %s12, 2
      // Predicated region
      $region49: #{resblock_forward.4} parent=47 // pred_check
        %p594 = pneg %p130
      $region50: #{resblock_forward.4} parent=47 // pred_check_branch
        %596 = sbr.rel (%p594) target = $region52
      $region51: #{resblock_forward.4} parent=47 // pred_region
        %p597 = scmp.lt.s32.totalorder %s18, 1
        %s598 = scalar_select %p597, %s18, 1
        %s599 = smul.addr %s598, 2
        %s600 = smul.addr %s599, 4
        %s601 = scalar_lea.vmem %s4, %s600
      $region52: #{resblock_forward.4} parent=47 // pred_fallthru
        _
      // Predicated region
      $region53: #{resblock_forward.4} parent=47 // pred_check
        %p602 = pneg %p156
      $region54: #{resblock_forward.4} parent=47 // pred_check_branch
        %604 = sbr.rel (%p602) target = $region56
      $region55: #{resblock_forward.4} parent=47 // pred_region
        %p605 = scmp.lt.s32.totalorder %s18, 1
        %s606 = scalar_select %p605, %s18, 1
        %s607 = smul.addr %s606, 4
        %s608 = scalar_lea.vmem %s5, %s607
      $region56: #{resblock_forward.4} parent=47 // pred_fallthru
        _
    $region48: #{resblock_forward.4} parent=5 // pred_fallthru
      _
  $region6: #{resblock_forward.4} parent=0 // loop_footer
    %s16 = sadd.s32 1, %s12
  $region7: #{resblock_forward.4} parent=0 // loop_footer_branch
    %11 = sbr.rel target = $region3
  $region8: #{resblock_forward.4} parent=0 // loop_exit
    _

</llo_original>
